<compile_context>
chip_gen: v7x
topology: tpu7x:2x2x1
jax: 0.10.0
libtpu: 0.0.40
codegen_flags: <defaults>
</compile_context>

<pallas_src>
import functools

import jax
import jax.numpy as jnp
import numpy as np
from jax.experimental import pallas as pl
from jax.experimental.pallas import tpu as pltpu

_EPS = 1e-5


# ------------------------------ sizing helpers ---------------------------------

def _round_up(x, m):
    return ((x + m - 1) // m) * m


@functools.lru_cache(maxsize=None)
def _vmem_capacity_bytes():
    """Physical per-core VMEM; conservative fallback if the query is unavailable."""
    try:
        return int(pltpu.get_tpu_info().vmem_capacity_bytes)
    except Exception:
        return 64 * 1024 * 1024          # v7x-sized (smallest current generation)


def _compiler_params():
    # ~85% of physical VMEM: well above the 16/32 MiB scoped default on v5e/v6e,
    # still under 64 MiB on v7x.
    return pltpu.CompilerParams(
        dimension_semantics=("parallel", "parallel"),
        vmem_limit_bytes=int(_vmem_capacity_bytes() * 0.85),
    )


def _choose_tile_l(L, cin, cout, itemsize, max_tile_l=None):
    """Largest 8-aligned L-tile whose double-buffered block footprint fits VMEM."""
    budget = int(_vmem_capacity_bytes() * 0.55)
    per_row = (2 * cin * itemsize          # x block, double-buffered
               + 2 * 2 * cout * itemsize   # out block, double-buffered
               + 8 * cout * 4)             # fp32 in-kernel intermediates (p, t0s, h)
    const = 2 * cin * 3 * cout * 4 + (1 << 16)
    tl = (budget - const) // max(per_row, 1)
    if max_tile_l is not None:
        tl = min(tl, max_tile_l)
    tl = min(tl, 8192, _round_up(L, 8))
    tl = max(8, (tl // 8) * 8)
    return int(tl)


# ----------------------------- Pallas kernel ------------------------------------

def _ct_block_kernel(x_ref, halo_ref, w_ref, bias_ref, o_ref, stats_ref=None,
                     *, cout, final, valid_len):
    """Fused ConvTranspose1d(k=3, s=2, p=1, op=1) [+ ELU + BN partial stats] tile.

    Decomposition (channels-last):
        y[2m]   = x[m] @ W1 + b
        y[2m+1] = x[m] @ W2 + x[m+1] @ W0 + b        (x[L] := 0)
    The previous layer's BatchNorm affine is pre-folded into w/bias by the wrapper,
    so x here is the *un-normalized* previous activation.

    x_ref    : (1, TL, Cin)      input tile
    halo_ref : (1, n_t, Cout)    precomputed tap-0 contribution of each tile's "next"
                                  input row (resident in VMEM for the whole batch row)
    w_ref    : (Cin, 3*Cout)     fused taps [scale*W1 | scale*W2 | scale*W0]
    bias_ref : (1, 3*Cout)       [b + shift@W1 | b + shift@(W2+W0) | -shift@W0]
    o_ref    : (1, TL, 2*Cout)   even samples in lanes [:Cout], odd in [Cout:]
    stats_ref: (1, 1, 2, 2*Cout) per-tile [sum; sum-of-squares]   (non-final only)
    """
    tt = pl.program_id(1)
    x = x_ref[0]                                               # (TL, Cin)
    w = w_ref[...]                                             # (Cin, 3*Cout)
    bias = bias_ref[...]                                       # (1, 3*Cout)
    tl = x.shape[0]

    # Single fused MXU matmul for all three taps.
    p = jnp.dot(x, w, preferred_element_type=jnp.float32)      # (TL, 3*Cout)

    # Shifted tap-0: row m needs tap0(row m+1). XLU sublane roll, then the last row
    # (whose "next" row lives in the next tile / is the zero pad) comes from the halo.
    t0 = p[:, 2 * cout:]
    t0s = pltpu.roll(t0, tl - 1, 0)                            # t0s[m] = t0[(m+1)%TL]
    rows = jax.lax.broadcasted_iota(jnp.int32, (tl, 1), 0)
    halo_row = halo_ref[0, pl.ds(tt, 1), :]                    # (1, Cout)
    t0s = jnp.where(rows == tl - 1, halo_row, t0s)
    if valid_len is not None:
        # Rows whose "next" sample is past the true length must see a zero *normalized*
        # input; -shift@W0 cancels the shift@W0 that was folded into the odd bias.
        t0s = jnp.where(rows + tt * tl + 1 < valid_len, t0s, bias[:, 2 * cout:])

    # Even lanes = y[2m], odd lanes = y[2m+1]; single lane-dense slab.
    y = jnp.concatenate([p[:, :cout], p[:, cout:2 * cout] + t0s], axis=1)
    y = y + bias[:, :2 * cout]

    if final:
        o_ref[0] = y.astype(o_ref.dtype)                       # single full-width store
        return

    # ELU (alpha = 1.0)
    h = jnp.where(y > 0, y, jnp.exp(jnp.minimum(y, 0.0)) - 1.0)
    o_ref[0] = h.astype(o_ref.dtype)                           # single full-width store

    # Per-tile BatchNorm partial statistics (reduced across the grid in the wrapper).
    if valid_len is not None:
        m = (rows + tt * tl < valid_len).astype(jnp.float32)
        hm = h * m
        s = jnp.sum(hm, axis=0, keepdims=True)
        s2 = jnp.sum(hm * h, axis=0, keepdims=True)
    else:
        s = jnp.sum(h, axis=0, keepdims=True)
        s2 = jnp.sum(h * h, axis=0, keepdims=True)
    stats_ref[0, 0, 0:1, :] = s
    stats_ref[0, 0, 1:2, :] = s2


# ------------------------------ JAX wrappers ------------------------------------

def conv1d_transpose_block(x_nlc, w, b, gamma, beta, in_scale, in_shift, final_layer,
                           *, max_tile_l=None, compute_dtype=jnp.float32):
    """x_nlc: (B, L, Cin) previous (un-normalized) activation.  w: (Cin, Cout, 3).

    Returns (h, scale, shift): h is (B, 2L, Cout) post-ELU (or conv output for the
    final layer); scale/shift are this layer's BN affine, to be folded into the NEXT
    layer's weights (None for the final layer).
    """
    B, L, Cin = x_nlc.shape
    Cout = w.shape[1]

    # Fused taps, lanes [W1 | W2 | W0]; fold the previous layer's BN scale/shift.
    w_all = jnp.concatenate([w[:, :, 1], w[:, :, 2], w[:, :, 0]], axis=1)  # (Cin, 3C)
    if in_scale is None:
        w_eff = w_all
        sw1 = sw2 = sw0 = jnp.zeros((Cout,), jnp.float32)
    else:
        w_eff = in_scale[:, None] * w_all
        sw1 = in_shift @ w[:, :, 1]
        sw2 = in_shift @ w[:, :, 2]
        sw0 = in_shift @ w[:, :, 0]
    bias = jnp.concatenate([b + sw1, b + sw2 + sw0, -sw0]).reshape(1, 3 * Cout)
    bias = bias.astype(jnp.float32)

    # Generation-aware tile sizing + cdiv grid with zero padding (no full-L fallback).
    itemsize = jnp.dtype(compute_dtype).itemsize
    TL = _choose_tile_l(L, Cin, Cout, itemsize, max_tile_l)
    n_t = (L + TL - 1) // TL
    L_pad = n_t * TL
    valid_len = None if L_pad == L else L

    x = x_nlc.astype(compute_dtype)
    if L_pad != L:
        x = jnp.concatenate(
            [x, jnp.zeros((B, L_pad - L, Cin), compute_dtype)], axis=1)

    # Halo strip: tap-0 contribution of each tile's "next" input row, precomputed in
    # the wrapper (tiny) so the kernel never does a 1-row MXU push.  For the last
    # tile the next row is the zero (normalized) pad -> -shift@W0 cancels the fold.
    w_t0 = w_eff[:, 2 * Cout:].astype(jnp.float32)                     # (Cin, Cout)
    halo_last = jnp.broadcast_to((-sw0).reshape(1, 1, Cout), (B, 1, Cout))
    if n_t > 1:
        x_next = x_nlc[:, TL::TL, :].astype(jnp.float32)               # (B, n_t-1, Cin)
        halo_real = jnp.einsum("btc,cf->btf", x_next, w_t0)            # (B, n_t-1, C)
        halo = jnp.concatenate([halo_real, halo_last], axis=1)
    else:
        halo = halo_last
    halo = halo.astype(jnp.float32)

    w_eff = w_eff.astype(compute_dtype)
    out_dtype = jnp.float32 if final_layer else compute_dtype

    kernel = functools.partial(_ct_block_kernel, cout=Cout, final=final_layer,
                               valid_len=valid_len)

    in_specs = [
        pl.BlockSpec((1, TL, Cin), lambda bb, tt: (bb, tt, 0)),
        pl.BlockSpec((1, n_t, Cout), lambda bb, tt: (bb, 0, 0)),   # resident per batch
        pl.BlockSpec((Cin, 3 * Cout), lambda bb, tt: (0, 0)),
        pl.BlockSpec((1, 3 * Cout), lambda bb, tt: (0, 0)),
    ]
    if final_layer:
        out_shape = jax.ShapeDtypeStruct((B, L_pad, 2 * Cout), out_dtype)
        out_specs = pl.BlockSpec((1, TL, 2 * Cout), lambda bb, tt: (bb, tt, 0))
    else:
        out_shape = (
            jax.ShapeDtypeStruct((B, L_pad, 2 * Cout), out_dtype),
            jax.ShapeDtypeStruct((B, n_t, 2, 2 * Cout), jnp.float32),
        )
        out_specs = (
            pl.BlockSpec((1, TL, 2 * Cout), lambda bb, tt: (bb, tt, 0)),
            pl.BlockSpec((1, 1, 2, 2 * Cout), lambda bb, tt: (bb, tt, 0, 0)),
        )

    res = pl.pallas_call(
        kernel,
        grid=(B, n_t),
        in_specs=in_specs,
        out_specs=out_specs,
        out_shape=out_shape,
        compiler_params=_compiler_params(),
    )(x, halo, w_eff, bias)

    if final_layer:
        h = res[:, :L] if L_pad != L else res
        return h.reshape(B, 2 * L, Cout), None, None            # free interleave reshape

    h, stats = res
    h = h[:, :L] if L_pad != L else h

    # Global BatchNorm statistics (training-mode forward: biased batch variance).
    sums = jnp.sum(stats, axis=(0, 1))                           # (2, 2*Cout)
    s = sums[0, :Cout] + sums[0, Cout:]
    s2 = sums[1, :Cout] + sums[1, Cout:]
    n = float(B * 2 * L)
    mean = s / n
    var = jnp.maximum(s2 / n - mean * mean, 0.0)
    out_scale = gamma * jax.lax.rsqrt(var + _EPS)
    out_shift = beta - mean * out_scale
    return h.reshape(B, 2 * L, Cout), out_scale, out_shift       # free interleave reshape


def decoder_forward(z_ncl, params, *, max_tile_l=None, compute_dtype=jnp.float32):
    """PyTorch-compatible interface: z_ncl is NCL (B, C, L); returns NCL."""
    h = jnp.transpose(z_ncl, (0, 2, 1))                          # NCL -> NLC (boundary only)
    scale = shift = None
    for i, p in enumerate(params):
        final = (i == len(params) - 1)
        h, scale, shift = conv1d_transpose_block(
            h, p["w"], p["b"], p["gamma"], p["beta"], scale, shift, final,
            max_tile_l=max_tile_l, compute_dtype=compute_dtype)
    return jnp.transpose(h, (0, 2, 1))                           # NLC -> NCL


def init_decoder_params(key, num_layers, initial_filters, filter_multiplier,
                        output_channels):
    params = []
    for i in range(num_layers):
        in_ch = initial_filters * filter_multiplier ** (num_layers - i - 1)
        out_ch = (initial_filters * filter_multiplier ** (num_layers - i - 2)
                  if i != num_layers - 1 else output_channels)
        key, kw, kb, kg, kbt = jax.random.split(key, 5)
        params.append(dict(
            w=0.1 * jax.random.normal(kw, (in_ch, out_ch, 3), jnp.float32),
            b=0.1 * jax.random.normal(kb, (out_ch,), jnp.float32),
            gamma=1.0 + 0.1 * jax.random.normal(kg, (out_ch,), jnp.float32),
            beta=0.1 * jax.random.normal(kbt, (out_ch,), jnp.float32),
        ))
    return params


# --------------------------- numpy reference check ------------------------------

def _ref_conv_transpose1d(x, w, b):                 # x: (B, Cin, L), w: (Cin, Cout, 3)
    B, Cin, L = x.shape
    _, Cout, K = w.shape
    stride, pad, outpad = 2, 1, 1
    Lout = (L - 1) * stride - 2 * pad + K + outpad
    y = np.zeros((B, Cout, Lout), np.float64)
    for i in range(L):
        for k in range(K):
            t = i * stride - pad + k
            if 0 <= t < Lout:
                y[:, :, t] += np.einsum("bc,cd->bd", x[:, :, i], w[:, :, k])
    return y + b[None, :, None]


def _ref_decoder(z, params):
    h = np.asarray(z, np.float64)
    for i, p in enumerate(params):
        w = np.asarray(p["w"], np.float64)
        b = np.asarray(p["b"], np.float64)
        y = _ref_conv_transpose1d(h, w, b)
        if i == len(params) - 1:
            h = y
        else:
            e = np.where(y > 0, y, np.exp(np.minimum(y, 0.0)) - 1.0)      # ELU
            mean = e.mean(axis=(0, 2), keepdims=True)
            var = e.var(axis=(0, 2), keepdims=True)                        # biased
            g = np.asarray(p["gamma"], np.float64)[None, :, None]
            bt = np.asarray(p["beta"], np.float64)[None, :, None]
            h = g * (e - mean) / np.sqrt(var + _EPS) + bt
    return h


# ----------------------------------- main ----------------------------------------

if __name__ == "__main__":
    num_layers = 3
    initial_filters = 8
    filter_multiplier = 2
    output_channels = 4
    B = 2
    in_ch0 = initial_filters * filter_multiplier ** (num_layers - 1)     # 32

    key = jax.random.PRNGKey(0)
    kz1, kz2, kp = jax.random.split(key, 3)
    params = init_decoder_params(kp, num_layers, initial_filters,
                                 filter_multiplier, output_channels)

    # Case 1: default (VMEM-sized) tiles, L divides cleanly -> single-tile fast path.
    L1 = 8
    z1 = jax.random.normal(kz1, (B, in_ch0, L1), jnp.float32)            # NCL, like PyTorch
    out1 = jax.block_until_ready(jax.jit(decoder_forward)(z1, params))
    assert out1.shape == (B, output_channels, L1 * 2 ** num_layers), out1.shape
    np.testing.assert_allclose(np.asarray(out1), _ref_decoder(np.asarray(z1), params),
                               rtol=2e-3, atol=2e-3)

    # Case 2: tiny tile cap + non-multiple-of-8 length -> exercises the multi-tile
    # halo path, the cdiv grid, zero padding and the in-kernel valid-length masking.
    L2 = 6
    z2 = jax.random.normal(kz2, (B, in_ch0, L2), jnp.float32)
    fwd2 = jax.jit(functools.partial(decoder_forward, max_tile_l=8))
    out2 = jax.block_until_ready(fwd2(z2, params))
    assert out2.shape == (B, output_channels, L2 * 2 ** num_layers), out2.shape
    np.testing.assert_allclose(np.asarray(out2), _ref_decoder(np.asarray(z2), params),
                               rtol=2e-3, atol=2e-3)

    print("KERNEL_OK")
</pallas_src>

<mosaic_0001>
module attributes {stable_mosaic.version = 11 : i64} {
  func.func @_ct_block_kernel(%arg0: i32, %arg1: i32, %arg2: memref<1x8x32xf32, #tpu.memory_space<vmem>>, %arg3: memref<1x1x16xf32, #tpu.memory_space<vmem>>, %arg4: memref<32x48xf32, #tpu.memory_space<vmem>>, %arg5: memref<1x48xf32, #tpu.memory_space<vmem>>, %arg6: memref<1x8x32xf32, #tpu.memory_space<vmem>>, %arg7: memref<1x1x2x32xf32, #tpu.memory_space<vmem>>) attributes {dimension_semantics = [#tpu.dimension_semantics<parallel>, #tpu.dimension_semantics<parallel>], iteration_bounds = array<i64: 2, 1>, scalar_prefetch = 0 : i64, scratch_operands = 0 : i64, tpu.core_type = #tpu.core_type<tc>, window_params = [{transform_indices = @transform_0, window_bounds = array<i64: 1, 8, 32>}, {transform_indices = @transform_1, window_bounds = array<i64: 1, 1, 16>}, {pipeline_mode = #tpu.pipeline_mode<synchronous>, transform_indices = @transform_2, window_bounds = array<i64: 32, 48>}, {pipeline_mode = #tpu.pipeline_mode<synchronous>, transform_indices = @transform_3, window_bounds = array<i64: 1, 48>}, {transform_indices = @transform_4, window_bounds = array<i64: 1, 8, 32>}, {transform_indices = @transform_5, window_bounds = array<i64: 1, 1, 2, 32>}]} {
    %c0 = arith.constant 0 : index
    %c0_0 = arith.constant 0 : index
    %c0_1 = arith.constant 0 : index
    %0 = vector.load %arg2[%c0, %c0_0, %c0_1] : memref<1x8x32xf32, #tpu.memory_space<vmem>>, vector<1x8x32xf32>
    %1 = vector.shape_cast %0 : vector<1x8x32xf32> to vector<8x32xf32>
    %c0_2 = arith.constant 0 : index
    %c0_3 = arith.constant 0 : index
    %2 = vector.load %arg4[%c0_2, %c0_3] : memref<32x48xf32, #tpu.memory_space<vmem>>, vector<32x48xf32>
    %c0_4 = arith.constant 0 : index
    %c0_5 = arith.constant 0 : index
    %3 = vector.load %arg5[%c0_4, %c0_5] : memref<1x48xf32, #tpu.memory_space<vmem>>, vector<1x48xf32>
    %cst = arith.constant dense<0.000000e+00> : vector<8x48xf32>
    %4 = tpu.matmul %1, %2, %cst {dimension_numbers = #tpu.dot_dimension_numbers<[1], [0], [0], [1], [0, 0, 1, 1], [], []>} : vector<8x32xf32>, vector<32x48xf32>, vector<8x48xf32> -> vector<8x48xf32>
    %5 = vector.extract_strided_slice %4 {offsets = [0, 32], sizes = [8, 16], strides = [1, 1]} : vector<8x48xf32> to vector<8x16xf32>
    %c7_i32 = arith.constant 7 : i32
    %6 = tpu.dynamic_rotate %5 by %c7_i32 dim 0 : vector<8x16xf32>, i32 -> vector<8x16xf32>
    %7 = tpu.iota {dimensions = array<i32: 0>} : vector<8x1xi32>
    %c0_6 = arith.constant 0 : index
    %8 = arith.index_cast %arg1 : i32 to index
    %c0_7 = arith.constant 0 : index
    %9 = vector.load %arg3[%c0_6, %8, %c0_7] : memref<1x1x16xf32, #tpu.memory_space<vmem>>, vector<1x1x16xf32>
    %10 = vector.shape_cast %9 : vector<1x1x16xf32> to vector<1x16xf32>
    %c7_i32_8 = arith.constant 7 : i32
    %11 = vector.broadcast %c7_i32_8 : i32 to vector<8x1xi32>
    %12 = arith.cmpi eq, %7, %11 : vector<8x1xi32>
    %13 = vector.shape_cast %12 : vector<8x1xi1> to vector<8x1xi1>
    %14 = vector.broadcast %13 : vector<8x1xi1> to vector<8x16xi1>
    %15 = vector.shape_cast %10 : vector<1x16xf32> to vector<1x16xf32>
    %16 = vector.broadcast %15 : vector<1x16xf32> to vector<8x16xf32>
    %17 = arith.select %14, %16, %6 : vector<8x16xi1>, vector<8x16xf32>
    %18 = vector.extract_strided_slice %4 {offsets = [0, 0], sizes = [8, 16], strides = [1, 1]} : vector<8x48xf32> to vector<8x16xf32>
    %19 = vector.extract_strided_slice %4 {offsets = [0, 16], sizes = [8, 16], strides = [1, 1]} : vector<8x48xf32> to vector<8x16xf32>
    %20 = arith.addf %19, %17 : vector<8x16xf32>
    %21 = tpu.concatenate %18, %20 in 1 : vector<8x16xf32>, vector<8x16xf32> -> vector<8x32xf32>
    %22 = vector.extract_strided_slice %3 {offsets = [0, 0], sizes = [1, 32], strides = [1, 1]} : vector<1x48xf32> to vector<1x32xf32>
    %23 = vector.broadcast %22 : vector<1x32xf32> to vector<8x32xf32>
    %24 = arith.addf %21, %23 : vector<8x32xf32>
    %cst_9 = arith.constant 0.000000e+00 : f32
    %25 = vector.broadcast %cst_9 : f32 to vector<8x32xf32>
    %26 = arith.cmpf ogt, %24, %25 : vector<8x32xf32>
    %cst_10 = arith.constant 0.000000e+00 : f32
    %27 = vector.broadcast %cst_10 : f32 to vector<8x32xf32>
    %28 = arith.minimumf %24, %27 : vector<8x32xf32>
    %29 = math.exp %28 : vector<8x32xf32>
    %cst_11 = arith.constant 1.000000e+00 : f32
    %30 = vector.broadcast %cst_11 : f32 to vector<8x32xf32>
    %31 = arith.subf %29, %30 : vector<8x32xf32>
    %32 = arith.select %26, %24, %31 : vector<8x32xi1>, vector<8x32xf32>
    %c0_12 = arith.constant 0 : index
    %c0_13 = arith.constant 0 : index
    %c0_14 = arith.constant 0 : index
    %33 = vector.load %arg6[%c0_12, %c0_13, %c0_14] : memref<1x8x32xf32, #tpu.memory_space<vmem>>, vector<1x8x32xf32>
    %34 = vector.shape_cast %33 : vector<1x8x32xf32> to vector<8x32xf32>
    %35 = vector.shape_cast %32 : vector<8x32xf32> to vector<1x8x32xf32>
    tpu.vector_store %arg6[%c0_12, %c0_13, %c0_14], %35 {strides = array<i32>} : memref<1x8x32xf32, #tpu.memory_space<vmem>>, vector<1x8x32xf32>,
    %cst_15 = arith.constant dense<0.000000e+00> : vector<32xf32>
    %36 = vector.multi_reduction <add>, %32, %cst_15 [0] : vector<8x32xf32> to vector<32xf32>
    %37 = vector.shape_cast %36 : vector<32xf32> to vector<1x32xf32>
    %38 = arith.mulf %32, %32 : vector<8x32xf32>
    %cst_16 = arith.constant dense<0.000000e+00> : vector<32xf32>
    %39 = vector.multi_reduction <add>, %38, %cst_16 [0] : vector<8x32xf32> to vector<32xf32>
    %40 = vector.shape_cast %39 : vector<32xf32> to vector<1x32xf32>
    %c0_17 = arith.constant 0 : index
    %c0_18 = arith.constant 0 : index
    %c0_19 = arith.constant 0 : index
    %c0_20 = arith.constant 0 : index
    %41 = vector.load %arg7[%c0_17, %c0_18, %c0_19, %c0_20] : memref<1x1x2x32xf32, #tpu.memory_space<vmem>>, vector<1x1x1x32xf32>
    %42 = vector.shape_cast %41 : vector<1x1x1x32xf32> to vector<1x32xf32>
    %43 = vector.shape_cast %37 : vector<1x32xf32> to vector<1x1x1x32xf32>
    tpu.vector_store %arg7[%c0_17, %c0_18, %c0_19, %c0_20], %43 {strides = array<i32>} : memref<1x1x2x32xf32, #tpu.memory_space<vmem>>, vector<1x1x1x32xf32>,
    %c0_21 = arith.constant 0 : index
    %c0_22 = arith.constant 0 : index
    %c1 = arith.constant 1 : index
    %c0_23 = arith.constant 0 : index
    %44 = vector.load %arg7[%c0_21, %c0_22, %c1, %c0_23] : memref<1x1x2x32xf32, #tpu.memory_space<vmem>>, vector<1x1x1x32xf32>
    %45 = vector.shape_cast %44 : vector<1x1x1x32xf32> to vector<1x32xf32>
    %46 = vector.shape_cast %40 : vector<1x32xf32> to vector<1x1x1x32xf32>
    tpu.vector_store %arg7[%c0_21, %c0_22, %c1, %c0_23], %46 {strides = array<i32>} : memref<1x1x2x32xf32, #tpu.memory_space<vmem>>, vector<1x1x1x32xf32>,
    return
  }
  func.func @transform_0(%arg0: i32, %arg1: i32) -> (i32, i32, i32) {
    %c0_i32 = arith.constant 0 : i32
    %c0_i32_0 = arith.constant 0 : i32
    return %arg0, %arg1, %c0_i32 : i32, i32, i32
  }
  func.func @transform_1(%arg0: i32, %arg1: i32) -> (i32, i32, i32) {
    %c0_i32 = arith.constant 0 : i32
    %c0_i32_0 = arith.constant 0 : i32
    %c0_i32_1 = arith.constant 0 : i32
    return %arg0, %c0_i32, %c0_i32_0 : i32, i32, i32
  }
  func.func @transform_2(%arg0: i32, %arg1: i32) -> (i32, i32) {
    %c0_i32 = arith.constant 0 : i32
    %c0_i32_0 = arith.constant 0 : i32
    %c0_i32_1 = arith.constant 0 : i32
    return %c0_i32, %c0_i32_0 : i32, i32
  }
  func.func @transform_3(%arg0: i32, %arg1: i32) -> (i32, i32) {
    %c0_i32 = arith.constant 0 : i32
    %c0_i32_0 = arith.constant 0 : i32
    %c0_i32_1 = arith.constant 0 : i32
    return %c0_i32, %c0_i32_0 : i32, i32
  }
  func.func @transform_4(%arg0: i32, %arg1: i32) -> (i32, i32, i32) {
    %c0_i32 = arith.constant 0 : i32
    %c0_i32_0 = arith.constant 0 : i32
    return %arg0, %arg1, %c0_i32 : i32, i32, i32
  }
  func.func @transform_5(%arg0: i32, %arg1: i32) -> (i32, i32, i32, i32) {
    %c0_i32 = arith.constant 0 : i32
    %c0_i32_0 = arith.constant 0 : i32
    %c0_i32_1 = arith.constant 0 : i32
    return %arg0, %arg1, %c0_i32, %c0_i32_0 : i32, i32, i32, i32
  }
}

module attributes {stable_mosaic.version = 11 : i64} {
  func.func @_ct_block_kernel(%arg0: i32, %arg1: i32, %arg2: memref<1x16x16xf32, #tpu.memory_space<vmem>>, %arg3: memref<1x1x8xf32, #tpu.memory_space<vmem>>, %arg4: memref<16x24xf32, #tpu.memory_space<vmem>>, %arg5: memref<1x24xf32, #tpu.memory_space<vmem>>, %arg6: memref<1x16x16xf32, #tpu.memory_space<vmem>>, %arg7: memref<1x1x2x16xf32, #tpu.memory_space<vmem>>) attributes {dimension_semantics = [#tpu.dimension_semantics<parallel>, #tpu.dimension_semantics<parallel>], iteration_bounds = array<i64: 2, 1>, scalar_prefetch = 0 : i64, scratch_operands = 0 : i64, tpu.core_type = #tpu.core_type<tc>, window_params = [{transform_indices = @transform_0, window_bounds = array<i64: 1, 16, 16>}, {transform_indices = @transform_1, window_bounds = array<i64: 1, 1, 8>}, {pipeline_mode = #tpu.pipeline_mode<synchronous>, transform_indices = @transform_2, window_bounds = array<i64: 16, 24>}, {pipeline_mode = #tpu.pipeline_mode<synchronous>, transform_indices = @transform_3, window_bounds = array<i64: 1, 24>}, {transform_indices = @transform_4, window_bounds = array<i64: 1, 16, 16>}, {transform_indices = @transform_5, window_bounds = array<i64: 1, 1, 2, 16>}]} {
    %c0 = arith.constant 0 : index
    %c0_0 = arith.constant 0 : index
    %c0_1 = arith.constant 0 : index
    %0 = vector.load %arg2[%c0, %c0_0, %c0_1] : memref<1x16x16xf32, #tpu.memory_space<vmem>>, vector<1x16x16xf32>
    %1 = vector.shape_cast %0 : vector<1x16x16xf32> to vector<16x16xf32>
    %c0_2 = arith.constant 0 : index
    %c0_3 = arith.constant 0 : index
    %2 = vector.load %arg4[%c0_2, %c0_3] : memref<16x24xf32, #tpu.memory_space<vmem>>, vector<16x24xf32>
    %c0_4 = arith.constant 0 : index
    %c0_5 = arith.constant 0 : index
    %3 = vector.load %arg5[%c0_4, %c0_5] : memref<1x24xf32, #tpu.memory_space<vmem>>, vector<1x24xf32>
    %cst = arith.constant dense<0.000000e+00> : vector<16x24xf32>
    %4 = tpu.matmul %1, %2, %cst {dimension_numbers = #tpu.dot_dimension_numbers<[1], [0], [0], [1], [0, 0, 1, 1], [], []>} : vector<16x16xf32>, vector<16x24xf32>, vector<16x24xf32> -> vector<16x24xf32>
    %5 = vector.extract_strided_slice %4 {offsets = [0, 16], sizes = [16, 8], strides = [1, 1]} : vector<16x24xf32> to vector<16x8xf32>
    %c15_i32 = arith.constant 15 : i32
    %6 = tpu.dynamic_rotate %5 by %c15_i32 dim 0 : vector<16x8xf32>, i32 -> vector<16x8xf32>
    %7 = tpu.iota {dimensions = array<i32: 0>} : vector<16x1xi32>
    %c0_6 = arith.constant 0 : index
    %8 = arith.index_cast %arg1 : i32 to index
    %c0_7 = arith.constant 0 : index
    %9 = vector.load %arg3[%c0_6, %8, %c0_7] : memref<1x1x8xf32, #tpu.memory_space<vmem>>, vector<1x1x8xf32>
    %10 = vector.shape_cast %9 : vector<1x1x8xf32> to vector<1x8xf32>
    %c15_i32_8 = arith.constant 15 : i32
    %11 = vector.broadcast %c15_i32_8 : i32 to vector<16x1xi32>
    %12 = arith.cmpi eq, %7, %11 : vector<16x1xi32>
    %13 = vector.shape_cast %12 : vector<16x1xi1> to vector<16x1xi1>
    %14 = vector.broadcast %13 : vector<16x1xi1> to vector<16x8xi1>
    %15 = vector.shape_cast %10 : vector<1x8xf32> to vector<1x8xf32>
    %16 = vector.broadcast %15 : vector<1x8xf32> to vector<16x8xf32>
    %17 = arith.select %14, %16, %6 : vector<16x8xi1>, vector<16x8xf32>
    %18 = vector.extract_strided_slice %4 {offsets = [0, 0], sizes = [16, 8], strides = [1, 1]} : vector<16x24xf32> to vector<16x8xf32>
    %19 = vector.extract_strided_slice %4 {offsets = [0, 8], sizes = [16, 8], strides = [1, 1]} : vector<16x24xf32> to vector<16x8xf32>
    %20 = arith.addf %19, %17 : vector<16x8xf32>
    %21 = tpu.concatenate %18, %20 in 1 : vector<16x8xf32>, vector<16x8xf32> -> vector<16x16xf32>
    %22 = vector.extract_strided_slice %3 {offsets = [0, 0], sizes = [1, 16], strides = [1, 1]} : vector<1x24xf32> to vector<1x16xf32>
    %23 = vector.broadcast %22 : vector<1x16xf32> to vector<16x16xf32>
    %24 = arith.addf %21, %23 : vector<16x16xf32>
    %cst_9 = arith.constant 0.000000e+00 : f32
    %25 = vector.broadcast %cst_9 : f32 to vector<16x16xf32>
    %26 = arith.cmpf ogt, %24, %25 : vector<16x16xf32>
    %cst_10 = arith.constant 0.000000e+00 : f32
    %27 = vector.broadcast %cst_10 : f32 to vector<16x16xf32>
    %28 = arith.minimumf %24, %27 : vector<16x16xf32>
    %29 = math.exp %28 : vector<16x16xf32>
    %cst_11 = arith.constant 1.000000e+00 : f32
    %30 = vector.broadcast %cst_11 : f32 to vector<16x16xf32>
    %31 = arith.subf %29, %30 : vector<16x16xf32>
    %32 = arith.select %26, %24, %31 : vector<16x16xi1>, vector<16x16xf32>
    %c0_12 = arith.constant 0 : index
    %c0_13 = arith.constant 0 : index
    %c0_14 = arith.constant 0 : index
    %33 = vector.load %arg6[%c0_12, %c0_13, %c0_14] : memref<1x16x16xf32, #tpu.memory_space<vmem>>, vector<1x16x16xf32>
    %34 = vector.shape_cast %33 : vector<1x16x16xf32> to vector<16x16xf32>
    %35 = vector.shape_cast %32 : vector<16x16xf32> to vector<1x16x16xf32>
    tpu.vector_store %arg6[%c0_12, %c0_13, %c0_14], %35 {strides = array<i32>} : memref<1x16x16xf32, #tpu.memory_space<vmem>>, vector<1x16x16xf32>,
    %cst_15 = arith.constant dense<0.000000e+00> : vector<16xf32>
    %36 = vector.multi_reduction <add>, %32, %cst_15 [0] : vector<16x16xf32> to vector<16xf32>
    %37 = vector.shape_cast %36 : vector<16xf32> to vector<1x16xf32>
    %38 = arith.mulf %32, %32 : vector<16x16xf32>
    %cst_16 = arith.constant dense<0.000000e+00> : vector<16xf32>
    %39 = vector.multi_reduction <add>, %38, %cst_16 [0] : vector<16x16xf32> to vector<16xf32>
    %40 = vector.shape_cast %39 : vector<16xf32> to vector<1x16xf32>
    %c0_17 = arith.constant 0 : index
    %c0_18 = arith.constant 0 : index
    %c0_19 = arith.constant 0 : index
    %c0_20 = arith.constant 0 : index
    %41 = vector.load %arg7[%c0_17, %c0_18, %c0_19, %c0_20] : memref<1x1x2x16xf32, #tpu.memory_space<vmem>>, vector<1x1x1x16xf32>
    %42 = vector.shape_cast %41 : vector<1x1x1x16xf32> to vector<1x16xf32>
    %43 = vector.shape_cast %37 : vector<1x16xf32> to vector<1x1x1x16xf32>
    tpu.vector_store %arg7[%c0_17, %c0_18, %c0_19, %c0_20], %43 {strides = array<i32>} : memref<1x1x2x16xf32, #tpu.memory_space<vmem>>, vector<1x1x1x16xf32>,
    %c0_21 = arith.constant 0 : index
    %c0_22 = arith.constant 0 : index
    %c1 = arith.constant 1 : index
    %c0_23 = arith.constant 0 : index
    %44 = vector.load %arg7[%c0_21, %c0_22, %c1, %c0_23] : memref<1x1x2x16xf32, #tpu.memory_space<vmem>>, vector<1x1x1x16xf32>
    %45 = vector.shape_cast %44 : vector<1x1x1x16xf32> to vector<1x16xf32>
    %46 = vector.shape_cast %40 : vector<1x16xf32> to vector<1x1x1x16xf32>
    tpu.vector_store %arg7[%c0_21, %c0_22, %c1, %c0_23], %46 {strides = array<i32>} : memref<1x1x2x16xf32, #tpu.memory_space<vmem>>, vector<1x1x1x16xf32>,
    return
  }
  func.func @transform_0(%arg0: i32, %arg1: i32) -> (i32, i32, i32) {
    %c0_i32 = arith.constant 0 : i32
    %c0_i32_0 = arith.constant 0 : i32
    return %arg0, %arg1, %c0_i32 : i32, i32, i32
  }
  func.func @transform_1(%arg0: i32, %arg1: i32) -> (i32, i32, i32) {
    %c0_i32 = arith.constant 0 : i32
    %c0_i32_0 = arith.constant 0 : i32
    %c0_i32_1 = arith.constant 0 : i32
    return %arg0, %c0_i32, %c0_i32_0 : i32, i32, i32
  }
  func.func @transform_2(%arg0: i32, %arg1: i32) -> (i32, i32) {
    %c0_i32 = arith.constant 0 : i32
    %c0_i32_0 = arith.constant 0 : i32
    %c0_i32_1 = arith.constant 0 : i32
    return %c0_i32, %c0_i32_0 : i32, i32
  }
  func.func @transform_3(%arg0: i32, %arg1: i32) -> (i32, i32) {
    %c0_i32 = arith.constant 0 : i32
    %c0_i32_0 = arith.constant 0 : i32
    %c0_i32_1 = arith.constant 0 : i32
    return %c0_i32, %c0_i32_0 : i32, i32
  }
  func.func @transform_4(%arg0: i32, %arg1: i32) -> (i32, i32, i32) {
    %c0_i32 = arith.constant 0 : i32
    %c0_i32_0 = arith.constant 0 : i32
    return %arg0, %arg1, %c0_i32 : i32, i32, i32
  }
  func.func @transform_5(%arg0: i32, %arg1: i32) -> (i32, i32, i32, i32) {
    %c0_i32 = arith.constant 0 : i32
    %c0_i32_0 = arith.constant 0 : i32
    %c0_i32_1 = arith.constant 0 : i32
    return %arg0, %arg1, %c0_i32, %c0_i32_0 : i32, i32, i32, i32
  }
}

module attributes {stable_mosaic.version = 11 : i64} {
  func.func @_ct_block_kernel(%arg0: i32, %arg1: i32, %arg2: memref<1x32x8xf32, #tpu.memory_space<vmem>>, %arg3: memref<1x1x4xf32, #tpu.memory_space<vmem>>, %arg4: memref<8x12xf32, #tpu.memory_space<vmem>>, %arg5: memref<1x12xf32, #tpu.memory_space<vmem>>, %arg6: memref<1x32x8xf32, #tpu.memory_space<vmem>>) attributes {dimension_semantics = [#tpu.dimension_semantics<parallel>, #tpu.dimension_semantics<parallel>], iteration_bounds = array<i64: 2, 1>, scalar_prefetch = 0 : i64, scratch_operands = 0 : i64, tpu.core_type = #tpu.core_type<tc>, window_params = [{transform_indices = @transform_0, window_bounds = array<i64: 1, 32, 8>}, {transform_indices = @transform_1, window_bounds = array<i64: 1, 1, 4>}, {pipeline_mode = #tpu.pipeline_mode<synchronous>, transform_indices = @transform_2, window_bounds = array<i64: 8, 12>}, {pipeline_mode = #tpu.pipeline_mode<synchronous>, transform_indices = @transform_3, window_bounds = array<i64: 1, 12>}, {transform_indices = @transform_4, window_bounds = array<i64: 1, 32, 8>}]} {
    %c0 = arith.constant 0 : index
    %c0_0 = arith.constant 0 : index
    %c0_1 = arith.constant 0 : index
    %0 = vector.load %arg2[%c0, %c0_0, %c0_1] : memref<1x32x8xf32, #tpu.memory_space<vmem>>, vector<1x32x8xf32>
    %1 = vector.shape_cast %0 : vector<1x32x8xf32> to vector<32x8xf32>
    %c0_2 = arith.constant 0 : index
    %c0_3 = arith.constant 0 : index
    %2 = vector.load %arg4[%c0_2, %c0_3] : memref<8x12xf32, #tpu.memory_space<vmem>>, vector<8x12xf32>
    %c0_4 = arith.constant 0 : index
    %c0_5 = arith.constant 0 : index
    %3 = vector.load %arg5[%c0_4, %c0_5] : memref<1x12xf32, #tpu.memory_space<vmem>>, vector<1x12xf32>
    %cst = arith.constant dense<0.000000e+00> : vector<32x12xf32>
    %4 = tpu.matmul %1, %2, %cst {dimension_numbers = #tpu.dot_dimension_numbers<[1], [0], [0], [1], [0, 0, 1, 1], [], []>} : vector<32x8xf32>, vector<8x12xf32>, vector<32x12xf32> -> vector<32x12xf32>
    %5 = vector.extract_strided_slice %4 {offsets = [0, 8], sizes = [32, 4], strides = [1, 1]} : vector<32x12xf32> to vector<32x4xf32>
    %c31_i32 = arith.constant 31 : i32
    %6 = tpu.dynamic_rotate %5 by %c31_i32 dim 0 : vector<32x4xf32>, i32 -> vector<32x4xf32>
    %7 = tpu.iota {dimensions = array<i32: 0>} : vector<32x1xi32>
    %c0_6 = arith.constant 0 : index
    %8 = arith.index_cast %arg1 : i32 to index
    %c0_7 = arith.constant 0 : index
    %9 = vector.load %arg3[%c0_6, %8, %c0_7] : memref<1x1x4xf32, #tpu.memory_space<vmem>>, vector<1x1x4xf32>
    %10 = vector.shape_cast %9 : vector<1x1x4xf32> to vector<1x4xf32>
    %c31_i32_8 = arith.constant 31 : i32
    %11 = vector.broadcast %c31_i32_8 : i32 to vector<32x1xi32>
    %12 = arith.cmpi eq, %7, %11 : vector<32x1xi32>
    %13 = vector.shape_cast %12 : vector<32x1xi1> to vector<32x1xi1>
    %14 = vector.broadcast %13 : vector<32x1xi1> to vector<32x4xi1>
    %15 = vector.shape_cast %10 : vector<1x4xf32> to vector<1x4xf32>
    %16 = vector.broadcast %15 : vector<1x4xf32> to vector<32x4xf32>
    %17 = arith.select %14, %16, %6 : vector<32x4xi1>, vector<32x4xf32>
    %18 = vector.extract_strided_slice %4 {offsets = [0, 0], sizes = [32, 4], strides = [1, 1]} : vector<32x12xf32> to vector<32x4xf32>
    %19 = vector.extract_strided_slice %4 {offsets = [0, 4], sizes = [32, 4], strides = [1, 1]} : vector<32x12xf32> to vector<32x4xf32>
    %20 = arith.addf %19, %17 : vector<32x4xf32>
    %21 = tpu.concatenate %18, %20 in 1 : vector<32x4xf32>, vector<32x4xf32> -> vector<32x8xf32>
    %22 = vector.extract_strided_slice %3 {offsets = [0, 0], sizes = [1, 8], strides = [1, 1]} : vector<1x12xf32> to vector<1x8xf32>
    %23 = vector.broadcast %22 : vector<1x8xf32> to vector<32x8xf32>
    %24 = arith.addf %21, %23 : vector<32x8xf32>
    %c0_9 = arith.constant 0 : index
    %c0_10 = arith.constant 0 : index
    %c0_11 = arith.constant 0 : index
    %25 = vector.load %arg6[%c0_9, %c0_10, %c0_11] : memref<1x32x8xf32, #tpu.memory_space<vmem>>, vector<1x32x8xf32>
    %26 = vector.shape_cast %25 : vector<1x32x8xf32> to vector<32x8xf32>
    %27 = vector.shape_cast %24 : vector<32x8xf32> to vector<1x32x8xf32>
    tpu.vector_store %arg6[%c0_9, %c0_10, %c0_11], %27 {strides = array<i32>} : memref<1x32x8xf32, #tpu.memory_space<vmem>>, vector<1x32x8xf32>,
    return
  }
  func.func @transform_0(%arg0: i32, %arg1: i32) -> (i32, i32, i32) {
    %c0_i32 = arith.constant 0 : i32
    %c0_i32_0 = arith.constant 0 : i32
    return %arg0, %arg1, %c0_i32 : i32, i32, i32
  }
  func.func @transform_1(%arg0: i32, %arg1: i32) -> (i32, i32, i32) {
    %c0_i32 = arith.constant 0 : i32
    %c0_i32_0 = arith.constant 0 : i32
    %c0_i32_1 = arith.constant 0 : i32
    return %arg0, %c0_i32, %c0_i32_0 : i32, i32, i32
  }
  func.func @transform_2(%arg0: i32, %arg1: i32) -> (i32, i32) {
    %c0_i32 = arith.constant 0 : i32
    %c0_i32_0 = arith.constant 0 : i32
    %c0_i32_1 = arith.constant 0 : i32
    return %c0_i32, %c0_i32_0 : i32, i32
  }
  func.func @transform_3(%arg0: i32, %arg1: i32) -> (i32, i32) {
    %c0_i32 = arith.constant 0 : i32
    %c0_i32_0 = arith.constant 0 : i32
    %c0_i32_1 = arith.constant 0 : i32
    return %c0_i32, %c0_i32_0 : i32, i32
  }
  func.func @transform_4(%arg0: i32, %arg1: i32) -> (i32, i32, i32) {
    %c0_i32 = arith.constant 0 : i32
    %c0_i32_0 = arith.constant 0 : i32
    return %arg0, %arg1, %c0_i32 : i32, i32, i32
  }
}

</mosaic_0001>

<llo_original>
// kernel: decoder_forward.3
$region0: #{decoder_forward.3}
  #allocation0 [shape = 'u32[]', space=smem, size = 0x4, offset = 0x4, fixed_abs, tag = 'smem constant byte address 0x4 - core index']
  #allocation1 [shape = 'u32[144,128]{1,0:T(1,128)}', space=vmem, size = 0x12000, scoped, tag = 'internal scratch']
  %s0 = inlined_call_operand.vmem [shape: f32[2,8,32], index: 0, kind: input, shape index: {}]
  %s1 = inlined_call_operand.vmem [shape: f32[2,1,16], index: 1, kind: input, shape index: {}]
  %s2 = inlined_call_operand.vmem [shape: f32[32,48], index: 2, kind: input, shape index: {}]
  %s3 = inlined_call_operand.vmem [shape: f32[1,48], index: 3, kind: input, shape index: {}]
  %s4 = inlined_call_operand.vmem [shape: f32[2,8,32], index: 4, kind: output, shape index: {0}]
  %s5 = inlined_call_operand.vmem [shape: f32[2,1,2,32], index: 5, kind: output, shape index: {1}]
  %6 = xla_tuple %s4, %s5
  %s7 = sld [smem:[#allocation0]]
  $region57: #{decoder_forward.3} parent=0
    _
  %s9 = ssub.s32 1, %s7
  %s10 = scalar_select 0, %s9, %s7
  loop: start=0, step=1, limit=4
  $region2: #{decoder_forward.3} parent=0 // loop_pre_header
    _
  $region3: #{decoder_forward.3} parent=0 // loop_header
    %s12 = sphi 0, %s16
    %p13 = scmp.ge.s32.totalorder %s12, 4
    %s19 = sphi 0, %s31
    %s20 = sphi 0, %s27
    %s21 = sphi 0, %s19
    %s22 = sphi 0, %s20
    %s23 = sphi 0, %s21
    %s24 = sphi 0, %s22
    %s36 = sphi 0, %s38
    %s39 = sphi 0, %s36
    %s40 = sphi 0, %s39
    %s56 = sphi 0, %s40
    %s62 = sphi 0, %s64
    %s65 = sphi 0, %s62
    %s66 = sphi 0, %s65
    %s82 = sphi 0, %s66
    %s86 = sphi 0, %s86
    %s88 = sphi 0, %s86
    %s89 = sphi 0, %s88
    %s103 = sphi 0, %s89
    %s107 = sphi 0, %s107
    %s109 = sphi 0, %s107
    %s110 = sphi 0, %s109
    %s124 = sphi 0, %s110
    %s132 = sphi 0, %s134
    %s135 = sphi 0, %s132
    %s136 = sphi 0, %s135
    %s152 = sphi 0, %s136
    %s160 = sphi 0, %s162
    %s163 = sphi 0, %s160
    %s164 = sphi 0, %s163
    %s180 = sphi 0, %s164
  $region4: #{decoder_forward.3} parent=0 // loop_header_branch
    %15 = sbr.rel (%p13) target = $region8
  $region5: #{decoder_forward.3} parent=0 // loop_body
    %s17 = ssub.s32 %s12, 1
    %s18 = ssub.s32 %s12, 2
    %s25 = sadd.s32 1, %s20
    %p26 = scmp.ge.s32.totalorder %s25, 1
    %s27 = scalar_select %p26, 0, %s25
    %s28 = sadd.s32 1, %s19
    %s29 = scalar_select %p26, %s28, %s19
    %p30 = scmp.ge.s32.totalorder %s29, 2
    %s31 = scalar_select %p30, 0, %s29
    %s32 = ssub.s32 %s19, %s31
    %s33 = ssub.s32 %s20, %s27
    %s34 = sor.u32 %s32, %s33
    %p35 = scmp.eq.s32.totalorder %s34, 0
    %s37 = sadd.s32 %s36, 1
    %s38 = scalar_select %p35, %s36, %s37
    %p41 = pneg %p35
    %p42 = scmp.eq.s32.totalorder %s12, 1
    %p43 = por %p41, %p42
    %p44 = scmp.ne.s32.totalorder %s36, %s39
    %p45 = scmp.eq.s32.totalorder %s12, 0
    %p46 = por %p44, %p45
    %p47 = scmp.ne.s32.totalorder %s36, %s39
    %p48 = scmp.eq.s32.totalorder %s17, 1
    %p49 = por %p47, %p48
    %p50 = scmp.ne.s32.totalorder %s39, %s40
    %p51 = scmp.eq.s32.totalorder %s17, 0
    %p52 = por %p50, %p51
    %p53 = scmp.ne.s32.totalorder %s39, %s40
    %p54 = scmp.eq.s32.totalorder %s18, 1
    %p55 = por %p53, %p54
    %p57 = scmp.ne.s32.totalorder %s40, %s56
    %p58 = scmp.eq.s32.totalorder %s18, 0
    %p59 = por %p57, %p58
    %s60 = ssub.s32 %s19, %s31
    %p61 = scmp.eq.s32.totalorder %s60, 0
    %s63 = sadd.s32 %s62, 1
    %s64 = scalar_select %p61, %s62, %s63
    %p67 = pneg %p61
    %p68 = scmp.eq.s32.totalorder %s12, 1
    %p69 = por %p67, %p68
    %p70 = scmp.ne.s32.totalorder %s62, %s65
    %p71 = scmp.eq.s32.totalorder %s12, 0
    %p72 = por %p70, %p71
    %p73 = scmp.ne.s32.totalorder %s62, %s65
    %p74 = scmp.eq.s32.totalorder %s17, 1
    %p75 = por %p73, %p74
    %p76 = scmp.ne.s32.totalorder %s65, %s66
    %p77 = scmp.eq.s32.totalorder %s17, 0
    %p78 = por %p76, %p77
    %p79 = scmp.ne.s32.totalorder %s65, %s66
    %p80 = scmp.eq.s32.totalorder %s18, 1
    %p81 = por %p79, %p80
    %p83 = scmp.ne.s32.totalorder %s66, %s82
    %p84 = scmp.eq.s32.totalorder %s18, 0
    %p85 = por %p83, %p84
    %s87 = sadd.s32 %s86, 1
    %p90 = scmp.eq.s32.totalorder %s12, 1
    %p91 = scmp.ne.s32.totalorder %s86, %s88
    %p92 = scmp.eq.s32.totalorder %s12, 0
    %p93 = por %p91, %p92
    %p94 = scmp.ne.s32.totalorder %s86, %s88
    %p95 = scmp.eq.s32.totalorder %s17, 1
    %p96 = por %p94, %p95
    %p97 = scmp.ne.s32.totalorder %s88, %s89
    %p98 = scmp.eq.s32.totalorder %s17, 0
    %p99 = por %p97, %p98
    %p100 = scmp.ne.s32.totalorder %s88, %s89
    %p101 = scmp.eq.s32.totalorder %s18, 1
    %p102 = por %p100, %p101
    %p104 = scmp.ne.s32.totalorder %s89, %s103
    %p105 = scmp.eq.s32.totalorder %s18, 0
    %p106 = por %p104, %p105
    %s108 = sadd.s32 %s107, 1
    %p111 = scmp.eq.s32.totalorder %s12, 1
    %p112 = scmp.ne.s32.totalorder %s107, %s109
    %p113 = scmp.eq.s32.totalorder %s12, 0
    %p114 = por %p112, %p113
    %p115 = scmp.ne.s32.totalorder %s107, %s109
    %p116 = scmp.eq.s32.totalorder %s17, 1
    %p117 = por %p115, %p116
    %p118 = scmp.ne.s32.totalorder %s109, %s110
    %p119 = scmp.eq.s32.totalorder %s17, 0
    %p120 = por %p118, %p119
    %p121 = scmp.ne.s32.totalorder %s109, %s110
    %p122 = scmp.eq.s32.totalorder %s18, 1
    %p123 = por %p121, %p122
    %p125 = scmp.ne.s32.totalorder %s110, %s124
    %p126 = scmp.eq.s32.totalorder %s18, 0
    %p127 = por %p125, %p126
    %s128 = ssub.s32 %s19, %s31
    %s129 = ssub.s32 %s20, %s27
    %s130 = sor.u32 %s128, %s129
    %p131 = scmp.eq.s32.totalorder %s130, 0
    %s133 = sadd.s32 %s132, 1
    %s134 = scalar_select %p131, %s132, %s133
    %p137 = pneg %p131
    %p138 = scmp.eq.s32.totalorder %s12, 1
    %p139 = por %p137, %p138
    %p140 = scmp.ne.s32.totalorder %s132, %s135
    %p141 = scmp.eq.s32.totalorder %s12, 0
    %p142 = por %p140, %p141
    %p143 = scmp.ne.s32.totalorder %s132, %s135
    %p144 = scmp.eq.s32.totalorder %s17, 1
    %p145 = por %p143, %p144
    %p146 = scmp.ne.s32.totalorder %s135, %s136
    %p147 = scmp.eq.s32.totalorder %s17, 0
    %p148 = por %p146, %p147
    %p149 = scmp.ne.s32.totalorder %s135, %s136
    %p150 = scmp.eq.s32.totalorder %s18, 1
    %p151 = por %p149, %p150
    %p153 = scmp.ne.s32.totalorder %s136, %s152
    %p154 = scmp.eq.s32.totalorder %s18, 0
    %p155 = por %p153, %p154
    %s156 = ssub.s32 %s19, %s31
    %s157 = ssub.s32 %s20, %s27
    %s158 = sor.u32 %s156, %s157
    %p159 = scmp.eq.s32.totalorder %s158, 0
    %s161 = sadd.s32 %s160, 1
    %s162 = scalar_select %p159, %s160, %s161
    %p165 = pneg %p159
    %p166 = scmp.eq.s32.totalorder %s12, 1
    %p167 = por %p165, %p166
    %p168 = scmp.ne.s32.totalorder %s160, %s163
    %p169 = scmp.eq.s32.totalorder %s12, 0
    %p170 = por %p168, %p169
    %p171 = scmp.ne.s32.totalorder %s160, %s163
    %p172 = scmp.eq.s32.totalorder %s17, 1
    %p173 = por %p171, %p172
    %p174 = scmp.ne.s32.totalorder %s163, %s164
    %p175 = scmp.eq.s32.totalorder %s17, 0
    %p176 = por %p174, %p175
    %p177 = scmp.ne.s32.totalorder %s163, %s164
    %p178 = scmp.eq.s32.totalorder %s18, 1
    %p179 = por %p177, %p178
    %p181 = scmp.ne.s32.totalorder %s164, %s180
    %p182 = scmp.eq.s32.totalorder %s18, 0
    %p183 = por %p181, %p182
    %p184 = scmp.le.s32.totalorder 1, %s12
    %p185 = scmp.lt.s32.totalorder %s12, 3
    %p186 = pnand %p184, %p185
    %p187 = pneg %p186
    // Predicated region
    $region9: #{decoder_forward.3} parent=5 // pred_check
      _
    $region10: #{decoder_forward.3} parent=5 // pred_check_branch
      %189 = sbr.rel (%p186) target = $region12
    $region11: #{decoder_forward.3} parent=5 // pred_region
      %s190 = ssub.s32 %s12, 1
      // Predicated region
      $region13: #{decoder_forward.3} parent=11 // pred_check
        %p191 = pneg %p99
      $region14: #{decoder_forward.3} parent=11 // pred_check_branch
        %193 = sbr.rel (%p191) target = $region16
      $region15: #{decoder_forward.3} parent=11 // pred_region
        _
      $region16: #{decoder_forward.3} parent=11 // pred_fallthru
        _
      // Predicated region
      $region17: #{decoder_forward.3} parent=11 // pred_check
        %p194 = pneg %p120
      $region18: #{decoder_forward.3} parent=11 // pred_check_branch
        %196 = sbr.rel (%p194) target = $region20
      $region19: #{decoder_forward.3} parent=11 // pred_region
        _
      $region20: #{decoder_forward.3} parent=11 // pred_fallthru
        _
    $region12: #{decoder_forward.3} parent=5 // pred_fallthru
      _
    %p197 = scmp.lt.s32.totalorder %s12, 2
    // Predicated region
    $region21: #{decoder_forward.3} parent=5 // pred_check
      %p198 = pneg %p197
    $region22: #{decoder_forward.3} parent=5 // pred_check_branch
      %200 = sbr.rel (%p198) target = $region24
    $region23: #{decoder_forward.3} parent=5 // pred_region
      // Predicated region
      $region25: #{decoder_forward.3} parent=23 // pred_check
        %p201 = pneg %p46
      $region26: #{decoder_forward.3} parent=23 // pred_check_branch
        %203 = sbr.rel (%p201) target = $region28
      $region27: #{decoder_forward.3} parent=23 // pred_region
        %p204 = scmp.lt.s32.totalorder %s19, 1
        %s205 = scalar_select %p204, %s19, 1
        %p206 = scmp.lt.s32.totalorder %s20, 0
        %s207 = scalar_select %p206, %s20, 0
        %s208 = sadd.s32 %s207, %s205
        %s209 = smul.addr %s208, 8
        %s210 = scalar_lea.vmem %s0, %s209
      $region28: #{decoder_forward.3} parent=23 // pred_fallthru
        _
      // Predicated region
      $region29: #{decoder_forward.3} parent=23 // pred_check
        %p211 = pneg %p72
      $region30: #{decoder_forward.3} parent=23 // pred_check_branch
        %213 = sbr.rel (%p211) target = $region32
      $region31: #{decoder_forward.3} parent=23 // pred_region
        %p214 = scmp.lt.s32.totalorder %s19, 1
        %s215 = scalar_select %p214, %s19, 1
        %s216 = scalar_lea.vmem %s1, %s215
      $region32: #{decoder_forward.3} parent=23 // pred_fallthru
        _
    $region24: #{decoder_forward.3} parent=5 // pred_fallthru
      _
    %p217 = scmp.le.s32.totalorder 1, %s12
    %p218 = scmp.lt.s32.totalorder %s12, 3
    %p219 = pnand %p217, %p218
    %p220 = pneg %p219
    // Predicated region
    $region33: #{decoder_forward.3} parent=5 // pred_check
      _
    $region34: #{decoder_forward.3} parent=5 // pred_check_branch
      %222 = sbr.rel (%p219) target = $region36
    $region35: #{decoder_forward.3} parent=5 // pred_region
      %s223 = ssub.s32 %s12, 1
      %p224 = scmp.lt.s32.totalorder %s21, 1
      %s225 = scalar_select %p224, %s21, 1
      %p226 = scmp.lt.s32.totalorder %s22, 0
      %s227 = scalar_select %p226, %s22, 0
      %s228 = sadd.s32 %s227, %s225
      %s229 = smul.addr %s228, 8
      %s230 = scalar_lea.vmem %s0, %s229
      %p231 = pneg %p52
      %p232 = pneg %p49
      %p233 = scmp.lt.s32.totalorder %s21, 1
      %s234 = scalar_select %p233, %s21, 1
      %s235 = scalar_lea.vmem %s1, %s234
      %p236 = pneg %p78
      %p237 = pneg %p75
      %p238 = pneg %p99
      %p239 = pneg %p96
      %p240 = pneg %p120
      %p241 = pneg %p117
      %p242 = pneg %p148
      %p243 = pneg %p145
      %p244 = scmp.lt.s32.totalorder %s21, 1
      %s245 = scalar_select %p244, %s21, 1
      %p246 = scmp.lt.s32.totalorder %s22, 0
      %s247 = scalar_select %p246, %s22, 0
      %s248 = sadd.s32 %s247, %s245
      %s249 = smul.addr %s248, 8
      %s250 = scalar_lea.vmem %s4, %s249
      %p251 = pneg %p176
      %p252 = pneg %p173
      %p253 = scmp.lt.s32.totalorder %s21, 1
      %s254 = scalar_select %p253, %s21, 1
      %p255 = scmp.lt.s32.totalorder %s22, 0
      %s256 = scalar_select %p255, %s22, 0
      %s257 = sadd.s32 %s256, %s254
      %s258 = smul.addr %s257, 2
      %s259 = scalar_lea.vmem %s5, %s258
      %p260 = scmp.lt.s32.totalorder %s21, 1
      %s261 = scalar_select %p260, %s21, 1
      %p262 = scmp.lt.s32.totalorder %s22, 0
      %s263 = scalar_select %p262, %s22, 0
      %s264 = sadd.s32 %s263, %s261
      %s265 = smul.addr %s264, 8
      %s266 = scalar_lea.vmem %s0, %s265
      %p267 = scmp.lt.s32.totalorder %s21, 1
      %s268 = scalar_select %p267, %s21, 1
      %s269 = scalar_lea.vmem %s1, %s268
      %p270 = scmp.lt.s32.totalorder %s21, 1
      %s271 = scalar_select %p270, %s21, 1
      %p272 = scmp.lt.s32.totalorder %s22, 0
      %s273 = scalar_select %p272, %s22, 0
      %s274 = sadd.s32 %s273, %s271
      %s275 = smul.addr %s274, 8
      %s276 = scalar_lea.vmem %s4, %s275
      %p277 = scmp.lt.s32.totalorder %s21, 1
      %s278 = scalar_select %p277, %s21, 1
      %p279 = scmp.lt.s32.totalorder %s22, 0
      %s280 = scalar_select %p279, %s22, 0
      %s281 = sadd.s32 %s280, %s278
      %s282 = smul.addr %s281, 2
      %s283 = scalar_lea.vmem %s5, %s282
      %v284 = vld [vmem:[%s266] sm:$0xff]
      %v285 = vld [vmem:[%s2] sm:$0xff]
      %v286 = vld [vmem:[%s2 + $0x8] sm:$0xff]
      %v287 = vld [vmem:[%s2 + $0x10] sm:$0xff]
      %v288 = vld [vmem:[%s2 + $0x18] sm:$0xff]
      %v289 = vld [vmem:[%s3] sm:$0x1]
      %vm290 = vcmask 261120
      %v292 = vsel %vm290, %v284, 0
      %294 = vmatprep.subr.mxu0 0.0
      %295 = vmatpush1.msra.mxu0 %v285
      %296 = vmatprep.subr.mxu0 0.0
      %297 = vmatpush1.msra.mxu0 %v286
      %298 = vmatprep.subr.mxu0 0.0
      %299 = vmatpush1.msra.mxu0 %v287
      %300 = vmatprep.subr.mxu0 0.0
      %301 = vmatpush1.msra.mxu0 %v288
      %302 = vmatprep.subr.mxu0 0.0
      %303 = vmatpush1.msra.mxu0 0.0
      %304 = vmatprep.subr.mxu0 0.0
      %305 = vmatpush1.msra.mxu0 0.0
      %306 = vmatprep.subr.mxu0 0.0
      %307 = vmatpush1.msra.mxu0 0.0
      %308 = vmatprep.subr.mxu0 0.0
      %309 = vmatpush1.msra.mxu0 0.0
      %310 = vmatprep.subr.mxu0 0.0
      %311 = vmatpush1.msra.mxu0 0.0
      %312 = vmatprep.subr.mxu0 0.0
      %313 = vmatpush1.msra.mxu0 0.0
      %314 = vmatprep.subr.mxu0 0.0
      %315 = vmatpush1.msra.mxu0 0.0
      %316 = vmatprep.subr.mxu0 0.0
      %317 = vmatpush1.msra.mxu0 0.0
      %318 = vmatprep.subr.mxu0 0.0
      %319 = vmatpush1.msra.mxu0 0.0
      %320 = vmatprep.subr.mxu0 0.0
      %321 = vmatpush1.msra.mxu0 0.0
      %322 = vmatprep.subr.mxu0 0.0
      %323 = vmatpush1.msra.mxu0 0.0
      %324 = vmatprep.subr.mxu0 0.0
      %325 = vmatpush1.msra.mxu0 0.0
      %326 = vmatprep.subr.mxu0 0.0
      %327 = vmatpush1.msra.mxu0 0.0
      %328 = vmatprep.subr.mxu0 0.0
      %329 = vmatpush1.msra.mxu0 0.0
      %330 = vmatprep.subr.mxu0 0.0
      %331 = vmatpush1.msra.mxu0 0.0
      %332 = vmatprep.subr.mxu0 0.0
      %333 = vmatpush1.msra.mxu0 0.0
      %334 = vmatprep.subr.mxu0 0.0
      %335 = vmatpush1.msra.mxu0 0.0
      %336 = vmatprep.subr.mxu0 0.0
      %337 = vmatpush1.msra.mxu0 0.0
      %338 = vmatprep.subr.mxu0 0.0
      %339 = vmatpush1.msra.mxu0 0.0
      %340 = vmatprep.subr.mxu0 0.0
      %341 = vmatpush1.msra.mxu0 0.0
      %342 = vmatprep.subr.mxu0 0.0
      %343 = vmatpush1.msra.mxu0 0.0
      %344 = vmatprep.subr.mxu0 0.0
      %345 = vmatpush1.msra.mxu0 0.0
      %346 = vmatprep.subr.mxu0 0.0
      %347 = vmatpush1.msra.mxu0 0.0
      %348 = vmatprep.subr.mxu0 0.0
      %349 = vmatpush1.msra.mxu0 0.0
      %350 = vmatprep.subr.mxu0 0.0
      %351 = vmatpush1.msra.mxu0 0.0
      %352 = vmatprep.subr.mxu0 0.0
      %353 = vmatpush1.msra.mxu0 0.0
      %354 = vmatprep.subr.mxu0 0.0
      %355 = vmatpush1.msra.mxu0 0.0
      %356 = vmatprep.subr.mxu0 0.0
      %357 = vmatpush1.msra.mxu0 0.0
      %358 = vmatprep.mubr.f32.mxu0 0.0
      %359 = vmatmul.mubr.f32.gmra.mrb[0].mxu0 %v292
      %v360 = vpop.f32.mrb[0].mxu0
      %v361 = vadd.f32 0.0, %v360
      %v362 = vpop.f32.mrb[0].mxu0
      %363 = vdwg.mxu0
      %365 = vrot.lane.b32.xlu0 %v361, 96
      %v366 = vpop.permute.xlu0 %365
      %v368 = vrot.slane %v366, 1
      %v369 = vlaneseq
      %v370 = vshrl.u32 %v369, 7
      %s371 = scalar_lea.vmem %s269, %s22
      %v372 = vld [vmem:[%s371] sm:$0x1]
      %vm373 = vcmp.eq.s32.totalorder %v370, 7
      %v374 = vsel %vm373, 1, 0
      %vm375 = vcmp.eq.s32.totalorder %v374, 1
      %v377 = vlaneseq
      %v378 = vshrl.u32 %v377, 7
      %v379 = vsub.s32 0, %v378
      %v380 = vrot.slane %v372, %v379
      %v382 = vsel %vm375, %v380, %v368
      %384 = vrot.lane.b32.xlu0 %v382, 16
      %v385 = vpop.permute.xlu0 %384
      %v387 = vadd.f32 %v361, %v385
      %vm388 = vcmask 130048
      %v389 = vsel %vm388, %v361, %v387
      %v391 = vlaneseq
      %v392 = vshrl.u32 %v391, 7
      %v393 = vsub.s32 0, %v392
      %v394 = vrot.slane %v289, %v393
      %v396 = vadd.f32 %v389, %v394
      %vm397 = vcmp.gt.f32.partialorder %v396, 0.0
      %v398 = vmin.f32 %v396, 0.0
      %v399 = vmul.f32 %v398, 1.442695
      %v400 = vpow.pop %v399
      %v401 = vsub.f32 %v400, 1.0
      %v402 = vsel %vm397, %v396, %v401
      %403 = vst.msk [vmem:[%s276] sm:$0xff] %vm290, %v402
      %v404 = vsel %vm290, %v402, 0.0
      %v405 = vrot.slane %v404, 4
      %v406 = vadd.f32 %v404, %v405
      %v407 = vrot.slane %v406, 2
      %v408 = vadd.f32 %v406, %v407
      %v409 = vrot.slane %v408, 1
      %v410 = vadd.f32 %v408, %v409
      %v411 = vmul.f32 %v402, %v402
      %v412 = vsel %vm290, %v411, 0.0
      %v413 = vrot.slane %v412, 4
      %v414 = vadd.f32 %v412, %v413
      %v415 = vrot.slane %v414, 2
      %v416 = vadd.f32 %v414, %v415
      %v417 = vrot.slane %v416, 1
      %v418 = vadd.f32 %v416, %v417
      %vm419 = vcmask 253952
      %420 = vst.msk [vmem:[%s283] sm:$0x1] %vm419, %v410
      %421 = vst.msk [vmem:[%s283 + $0x1] sm:$0x1] %vm419, %v418
      %p422 = scmp.lt.s32.totalorder %s21, 1
      %s423 = scalar_select %p422, %s21, 1
      %p424 = scmp.lt.s32.totalorder %s22, 0
      %s425 = scalar_select %p424, %s22, 0
      %s426 = sadd.s32 %s425, %s423
      %s427 = smul.addr %s426, 8
      %s428 = scalar_lea.vmem %s4, %s427
      %p429 = scmp.lt.s32.totalorder %s21, 1
      %s430 = scalar_select %p429, %s21, 1
      %p431 = scmp.lt.s32.totalorder %s22, 0
      %s432 = scalar_select %p431, %s22, 0
      %s433 = sadd.s32 %s432, %s430
      %s434 = smul.addr %s433, 2
      %s435 = scalar_lea.vmem %s5, %s434
      // Predicated region
      $region37: #{decoder_forward.3} parent=35 // pred_check
        %p436 = pneg %p145
      $region38: #{decoder_forward.3} parent=35 // pred_check_branch
        %438 = sbr.rel (%p436) target = $region40
      $region39: #{decoder_forward.3} parent=35 // pred_region
        _
      $region40: #{decoder_forward.3} parent=35 // pred_fallthru
        _
      // Predicated region
      $region41: #{decoder_forward.3} parent=35 // pred_check
        %p439 = pneg %p173
      $region42: #{decoder_forward.3} parent=35 // pred_check_branch
        %441 = sbr.rel (%p439) target = $region44
      $region43: #{decoder_forward.3} parent=35 // pred_region
        _
      $region44: #{decoder_forward.3} parent=35 // pred_fallthru
        _
    $region36: #{decoder_forward.3} parent=5 // pred_fallthru
      _
    %p442 = scmp.le.s32.totalorder 2, %s12
    // Predicated region
    $region45: #{decoder_forward.3} parent=5 // pred_check
      %p443 = pneg %p442
    $region46: #{decoder_forward.3} parent=5 // pred_check_branch
      %445 = sbr.rel (%p443) target = $region48
    $region47: #{decoder_forward.3} parent=5 // pred_region
      %s446 = ssub.s32 %s12, 2
      // Predicated region
      $region49: #{decoder_forward.3} parent=47 // pred_check
        %p447 = pneg %p151
      $region50: #{decoder_forward.3} parent=47 // pred_check_branch
        %449 = sbr.rel (%p447) target = $region52
      $region51: #{decoder_forward.3} parent=47 // pred_region
        %p450 = scmp.lt.s32.totalorder %s23, 1
        %s451 = scalar_select %p450, %s23, 1
        %p452 = scmp.lt.s32.totalorder %s24, 0
        %s453 = scalar_select %p452, %s24, 0
        %s454 = sadd.s32 %s453, %s451
        %s455 = smul.addr %s454, 8
        %s456 = scalar_lea.vmem %s4, %s455
      $region52: #{decoder_forward.3} parent=47 // pred_fallthru
        _
      // Predicated region
      $region53: #{decoder_forward.3} parent=47 // pred_check
        %p457 = pneg %p179
      $region54: #{decoder_forward.3} parent=47 // pred_check_branch
        %459 = sbr.rel (%p457) target = $region56
      $region55: #{decoder_forward.3} parent=47 // pred_region
        %p460 = scmp.lt.s32.totalorder %s23, 1
        %s461 = scalar_select %p460, %s23, 1
        %p462 = scmp.lt.s32.totalorder %s24, 0
        %s463 = scalar_select %p462, %s24, 0
        %s464 = sadd.s32 %s463, %s461
        %s465 = smul.addr %s464, 2
        %s466 = scalar_lea.vmem %s5, %s465
      $region56: #{decoder_forward.3} parent=47 // pred_fallthru
        _
    $region48: #{decoder_forward.3} parent=5 // pred_fallthru
      _
  $region6: #{decoder_forward.3} parent=0 // loop_footer
    %s16 = sadd.s32 1, %s12
  $region7: #{decoder_forward.3} parent=0 // loop_footer_branch
    %11 = sbr.rel target = $region3
  $region8: #{decoder_forward.3} parent=0 // loop_exit
    _

// kernel: decoder_forward.4
$region0: #{decoder_forward.4}
  #allocation0 [shape = 'u32[]', space=smem, size = 0x4, offset = 0x4, fixed_abs, tag = 'smem constant byte address 0x4 - core index']
  #allocation1 [shape = 'u32[144,128]{1,0:T(1,128)}', space=vmem, size = 0x12000, scoped, tag = 'internal scratch']
  %s0 = inlined_call_operand.vmem [shape: f32[2,16,16], index: 0, kind: input, shape index: {}]
  %s1 = inlined_call_operand.vmem [shape: f32[2,1,8], index: 1, kind: input, shape index: {}]
  %s2 = inlined_call_operand.vmem [shape: f32[16,24], index: 2, kind: input, shape index: {}]
  %s3 = inlined_call_operand.vmem [shape: f32[1,24], index: 3, kind: input, shape index: {}]
  %s4 = inlined_call_operand.vmem [shape: f32[2,16,16], index: 4, kind: output, shape index: {0}]
  %s5 = inlined_call_operand.vmem [shape: f32[2,1,2,16], index: 5, kind: output, shape index: {1}]
  %6 = xla_tuple %s4, %s5
  %s7 = sld [smem:[#allocation0]]
  $region57: #{decoder_forward.4} parent=0
    _
  %s9 = ssub.s32 1, %s7
  %s10 = scalar_select 0, %s9, %s7
  loop: start=0, step=1, limit=4
  $region2: #{decoder_forward.4} parent=0 // loop_pre_header
    _
  $region3: #{decoder_forward.4} parent=0 // loop_header
    %s12 = sphi 0, %s16
    %p13 = scmp.ge.s32.totalorder %s12, 4
    %s19 = sphi 0, %s31
    %s20 = sphi 0, %s27
    %s21 = sphi 0, %s19
    %s22 = sphi 0, %s20
    %s23 = sphi 0, %s21
    %s24 = sphi 0, %s22
    %s36 = sphi 0, %s38
    %s39 = sphi 0, %s36
    %s40 = sphi 0, %s39
    %s56 = sphi 0, %s40
    %s62 = sphi 0, %s64
    %s65 = sphi 0, %s62
    %s66 = sphi 0, %s65
    %s82 = sphi 0, %s66
    %s86 = sphi 0, %s86
    %s88 = sphi 0, %s86
    %s89 = sphi 0, %s88
    %s103 = sphi 0, %s89
    %s107 = sphi 0, %s107
    %s109 = sphi 0, %s107
    %s110 = sphi 0, %s109
    %s124 = sphi 0, %s110
    %s132 = sphi 0, %s134
    %s135 = sphi 0, %s132
    %s136 = sphi 0, %s135
    %s152 = sphi 0, %s136
    %s160 = sphi 0, %s162
    %s163 = sphi 0, %s160
    %s164 = sphi 0, %s163
    %s180 = sphi 0, %s164
  $region4: #{decoder_forward.4} parent=0 // loop_header_branch
    %15 = sbr.rel (%p13) target = $region8
  $region5: #{decoder_forward.4} parent=0 // loop_body
    %s17 = ssub.s32 %s12, 1
    %s18 = ssub.s32 %s12, 2
    %s25 = sadd.s32 1, %s20
    %p26 = scmp.ge.s32.totalorder %s25, 1
    %s27 = scalar_select %p26, 0, %s25
    %s28 = sadd.s32 1, %s19
    %s29 = scalar_select %p26, %s28, %s19
    %p30 = scmp.ge.s32.totalorder %s29, 2
    %s31 = scalar_select %p30, 0, %s29
    %s32 = ssub.s32 %s19, %s31
    %s33 = ssub.s32 %s20, %s27
    %s34 = sor.u32 %s32, %s33
    %p35 = scmp.eq.s32.totalorder %s34, 0
    %s37 = sadd.s32 %s36, 1
    %s38 = scalar_select %p35, %s36, %s37
    %p41 = pneg %p35
    %p42 = scmp.eq.s32.totalorder %s12, 1
    %p43 = por %p41, %p42
    %p44 = scmp.ne.s32.totalorder %s36, %s39
    %p45 = scmp.eq.s32.totalorder %s12, 0
    %p46 = por %p44, %p45
    %p47 = scmp.ne.s32.totalorder %s36, %s39
    %p48 = scmp.eq.s32.totalorder %s17, 1
    %p49 = por %p47, %p48
    %p50 = scmp.ne.s32.totalorder %s39, %s40
    %p51 = scmp.eq.s32.totalorder %s17, 0
    %p52 = por %p50, %p51
    %p53 = scmp.ne.s32.totalorder %s39, %s40
    %p54 = scmp.eq.s32.totalorder %s18, 1
    %p55 = por %p53, %p54
    %p57 = scmp.ne.s32.totalorder %s40, %s56
    %p58 = scmp.eq.s32.totalorder %s18, 0
    %p59 = por %p57, %p58
    %s60 = ssub.s32 %s19, %s31
    %p61 = scmp.eq.s32.totalorder %s60, 0
    %s63 = sadd.s32 %s62, 1
    %s64 = scalar_select %p61, %s62, %s63
    %p67 = pneg %p61
    %p68 = scmp.eq.s32.totalorder %s12, 1
    %p69 = por %p67, %p68
    %p70 = scmp.ne.s32.totalorder %s62, %s65
    %p71 = scmp.eq.s32.totalorder %s12, 0
    %p72 = por %p70, %p71
    %p73 = scmp.ne.s32.totalorder %s62, %s65
    %p74 = scmp.eq.s32.totalorder %s17, 1
    %p75 = por %p73, %p74
    %p76 = scmp.ne.s32.totalorder %s65, %s66
    %p77 = scmp.eq.s32.totalorder %s17, 0
    %p78 = por %p76, %p77
    %p79 = scmp.ne.s32.totalorder %s65, %s66
    %p80 = scmp.eq.s32.totalorder %s18, 1
    %p81 = por %p79, %p80
    %p83 = scmp.ne.s32.totalorder %s66, %s82
    %p84 = scmp.eq.s32.totalorder %s18, 0
    %p85 = por %p83, %p84
    %s87 = sadd.s32 %s86, 1
    %p90 = scmp.eq.s32.totalorder %s12, 1
    %p91 = scmp.ne.s32.totalorder %s86, %s88
    %p92 = scmp.eq.s32.totalorder %s12, 0
    %p93 = por %p91, %p92
    %p94 = scmp.ne.s32.totalorder %s86, %s88
    %p95 = scmp.eq.s32.totalorder %s17, 1
    %p96 = por %p94, %p95
    %p97 = scmp.ne.s32.totalorder %s88, %s89
    %p98 = scmp.eq.s32.totalorder %s17, 0
    %p99 = por %p97, %p98
    %p100 = scmp.ne.s32.totalorder %s88, %s89
    %p101 = scmp.eq.s32.totalorder %s18, 1
    %p102 = por %p100, %p101
    %p104 = scmp.ne.s32.totalorder %s89, %s103
    %p105 = scmp.eq.s32.totalorder %s18, 0
    %p106 = por %p104, %p105
    %s108 = sadd.s32 %s107, 1
    %p111 = scmp.eq.s32.totalorder %s12, 1
    %p112 = scmp.ne.s32.totalorder %s107, %s109
    %p113 = scmp.eq.s32.totalorder %s12, 0
    %p114 = por %p112, %p113
    %p115 = scmp.ne.s32.totalorder %s107, %s109
    %p116 = scmp.eq.s32.totalorder %s17, 1
    %p117 = por %p115, %p116
    %p118 = scmp.ne.s32.totalorder %s109, %s110
    %p119 = scmp.eq.s32.totalorder %s17, 0
    %p120 = por %p118, %p119
    %p121 = scmp.ne.s32.totalorder %s109, %s110
    %p122 = scmp.eq.s32.totalorder %s18, 1
    %p123 = por %p121, %p122
    %p125 = scmp.ne.s32.totalorder %s110, %s124
    %p126 = scmp.eq.s32.totalorder %s18, 0
    %p127 = por %p125, %p126
    %s128 = ssub.s32 %s19, %s31
    %s129 = ssub.s32 %s20, %s27
    %s130 = sor.u32 %s128, %s129
    %p131 = scmp.eq.s32.totalorder %s130, 0
    %s133 = sadd.s32 %s132, 1
    %s134 = scalar_select %p131, %s132, %s133
    %p137 = pneg %p131
    %p138 = scmp.eq.s32.totalorder %s12, 1
    %p139 = por %p137, %p138
    %p140 = scmp.ne.s32.totalorder %s132, %s135
    %p141 = scmp.eq.s32.totalorder %s12, 0
    %p142 = por %p140, %p141
    %p143 = scmp.ne.s32.totalorder %s132, %s135
    %p144 = scmp.eq.s32.totalorder %s17, 1
    %p145 = por %p143, %p144
    %p146 = scmp.ne.s32.totalorder %s135, %s136
    %p147 = scmp.eq.s32.totalorder %s17, 0
    %p148 = por %p146, %p147
    %p149 = scmp.ne.s32.totalorder %s135, %s136
    %p150 = scmp.eq.s32.totalorder %s18, 1
    %p151 = por %p149, %p150
    %p153 = scmp.ne.s32.totalorder %s136, %s152
    %p154 = scmp.eq.s32.totalorder %s18, 0
    %p155 = por %p153, %p154
    %s156 = ssub.s32 %s19, %s31
    %s157 = ssub.s32 %s20, %s27
    %s158 = sor.u32 %s156, %s157
    %p159 = scmp.eq.s32.totalorder %s158, 0
    %s161 = sadd.s32 %s160, 1
    %s162 = scalar_select %p159, %s160, %s161
    %p165 = pneg %p159
    %p166 = scmp.eq.s32.totalorder %s12, 1
    %p167 = por %p165, %p166
    %p168 = scmp.ne.s32.totalorder %s160, %s163
    %p169 = scmp.eq.s32.totalorder %s12, 0
    %p170 = por %p168, %p169
    %p171 = scmp.ne.s32.totalorder %s160, %s163
    %p172 = scmp.eq.s32.totalorder %s17, 1
    %p173 = por %p171, %p172
    %p174 = scmp.ne.s32.totalorder %s163, %s164
    %p175 = scmp.eq.s32.totalorder %s17, 0
    %p176 = por %p174, %p175
    %p177 = scmp.ne.s32.totalorder %s163, %s164
    %p178 = scmp.eq.s32.totalorder %s18, 1
    %p179 = por %p177, %p178
    %p181 = scmp.ne.s32.totalorder %s164, %s180
    %p182 = scmp.eq.s32.totalorder %s18, 0
    %p183 = por %p181, %p182
    %p184 = scmp.le.s32.totalorder 1, %s12
    %p185 = scmp.lt.s32.totalorder %s12, 3
    %p186 = pnand %p184, %p185
    %p187 = pneg %p186
    // Predicated region
    $region9: #{decoder_forward.4} parent=5 // pred_check
      _
    $region10: #{decoder_forward.4} parent=5 // pred_check_branch
      %189 = sbr.rel (%p186) target = $region12
    $region11: #{decoder_forward.4} parent=5 // pred_region
      %s190 = ssub.s32 %s12, 1
      // Predicated region
      $region13: #{decoder_forward.4} parent=11 // pred_check
        %p191 = pneg %p99
      $region14: #{decoder_forward.4} parent=11 // pred_check_branch
        %193 = sbr.rel (%p191) target = $region16
      $region15: #{decoder_forward.4} parent=11 // pred_region
        _
      $region16: #{decoder_forward.4} parent=11 // pred_fallthru
        _
      // Predicated region
      $region17: #{decoder_forward.4} parent=11 // pred_check
        %p194 = pneg %p120
      $region18: #{decoder_forward.4} parent=11 // pred_check_branch
        %196 = sbr.rel (%p194) target = $region20
      $region19: #{decoder_forward.4} parent=11 // pred_region
        _
      $region20: #{decoder_forward.4} parent=11 // pred_fallthru
        _
    $region12: #{decoder_forward.4} parent=5 // pred_fallthru
      _
    %p197 = scmp.lt.s32.totalorder %s12, 2
    // Predicated region
    $region21: #{decoder_forward.4} parent=5 // pred_check
      %p198 = pneg %p197
    $region22: #{decoder_forward.4} parent=5 // pred_check_branch
      %200 = sbr.rel (%p198) target = $region24
    $region23: #{decoder_forward.4} parent=5 // pred_region
      // Predicated region
      $region25: #{decoder_forward.4} parent=23 // pred_check
        %p201 = pneg %p46
      $region26: #{decoder_forward.4} parent=23 // pred_check_branch
        %203 = sbr.rel (%p201) target = $region28
      $region27: #{decoder_forward.4} parent=23 // pred_region
        %s204 = smul.u32 2, %s20
        %p205 = scmp.lt.s32.totalorder %s19, 1
        %s206 = scalar_select %p205, %s19, 1
        %p207 = scmp.lt.s32.totalorder %s204, 1
        %s208 = scalar_select %p207, %s204, 1
        %s209 = smul.addr %s206, 2
        %s210 = sadd.s32 %s208, %s209
        %s211 = smul.addr %s210, 8
        %s212 = scalar_lea.vmem %s0, %s211
        %s213 = smul.u32 2, %s20
      $region28: #{decoder_forward.4} parent=23 // pred_fallthru
        _
      // Predicated region
      $region29: #{decoder_forward.4} parent=23 // pred_check
        %p214 = pneg %p72
      $region30: #{decoder_forward.4} parent=23 // pred_check_branch
        %216 = sbr.rel (%p214) target = $region32
      $region31: #{decoder_forward.4} parent=23 // pred_region
        %p217 = scmp.lt.s32.totalorder %s19, 1
        %s218 = scalar_select %p217, %s19, 1
        %s219 = scalar_lea.vmem %s1, %s218
      $region32: #{decoder_forward.4} parent=23 // pred_fallthru
        _
    $region24: #{decoder_forward.4} parent=5 // pred_fallthru
      _
    %p220 = scmp.le.s32.totalorder 1, %s12
    %p221 = scmp.lt.s32.totalorder %s12, 3
    %p222 = pnand %p220, %p221
    %p223 = pneg %p222
    // Predicated region
    $region33: #{decoder_forward.4} parent=5 // pred_check
      _
    $region34: #{decoder_forward.4} parent=5 // pred_check_branch
      %225 = sbr.rel (%p222) target = $region36
    $region35: #{decoder_forward.4} parent=5 // pred_region
      %s226 = ssub.s32 %s12, 1
      %s227 = smul.u32 2, %s22
      %p228 = scmp.lt.s32.totalorder %s21, 1
      %s229 = scalar_select %p228, %s21, 1
      %p230 = scmp.lt.s32.totalorder %s227, 1
      %s231 = scalar_select %p230, %s227, 1
      %s232 = smul.addr %s229, 2
      %s233 = sadd.s32 %s231, %s232
      %s234 = smul.addr %s233, 8
      %s235 = scalar_lea.vmem %s0, %s234
      %p236 = pneg %p52
      %p237 = pneg %p49
      %p238 = scmp.lt.s32.totalorder %s21, 1
      %s239 = scalar_select %p238, %s21, 1
      %s240 = scalar_lea.vmem %s1, %s239
      %p241 = pneg %p78
      %p242 = pneg %p75
      %p243 = pneg %p99
      %p244 = pneg %p96
      %p245 = pneg %p120
      %p246 = pneg %p117
      %p247 = pneg %p148
      %p248 = pneg %p145
      %s249 = smul.u32 2, %s22
      %p250 = scmp.lt.s32.totalorder %s21, 1
      %s251 = scalar_select %p250, %s21, 1
      %p252 = scmp.lt.s32.totalorder %s249, 1
      %s253 = scalar_select %p252, %s249, 1
      %s254 = smul.addr %s251, 2
      %s255 = sadd.s32 %s253, %s254
      %s256 = smul.addr %s255, 8
      %s257 = scalar_lea.vmem %s4, %s256
      %p258 = pneg %p176
      %p259 = pneg %p173
      %p260 = scmp.lt.s32.totalorder %s21, 1
      %s261 = scalar_select %p260, %s21, 1
      %p262 = scmp.lt.s32.totalorder %s22, 0
      %s263 = scalar_select %p262, %s22, 0
      %s264 = sadd.s32 %s263, %s261
      %s265 = smul.addr %s264, 2
      %s266 = scalar_lea.vmem %s5, %s265
      %s267 = smul.u32 2, %s22
      %p268 = scmp.lt.s32.totalorder %s21, 1
      %s269 = scalar_select %p268, %s21, 1
      %p270 = scmp.lt.s32.totalorder %s267, 1
      %s271 = scalar_select %p270, %s267, 1
      %s272 = smul.addr %s269, 2
      %s273 = sadd.s32 %s271, %s272
      %s274 = smul.addr %s273, 8
      %s275 = scalar_lea.vmem %s0, %s274
      %s276 = smul.u32 2, %s22
      %p277 = scmp.lt.s32.totalorder %s21, 1
      %s278 = scalar_select %p277, %s21, 1
      %s279 = scalar_lea.vmem %s1, %s278
      %s280 = smul.u32 2, %s22
      %p281 = scmp.lt.s32.totalorder %s21, 1
      %s282 = scalar_select %p281, %s21, 1
      %p283 = scmp.lt.s32.totalorder %s280, 1
      %s284 = scalar_select %p283, %s280, 1
      %s285 = smul.addr %s282, 2
      %s286 = sadd.s32 %s284, %s285
      %s287 = smul.addr %s286, 8
      %s288 = scalar_lea.vmem %s4, %s287
      %s289 = smul.u32 2, %s22
      %p290 = scmp.lt.s32.totalorder %s21, 1
      %s291 = scalar_select %p290, %s21, 1
      %p292 = scmp.lt.s32.totalorder %s22, 0
      %s293 = scalar_select %p292, %s22, 0
      %s294 = sadd.s32 %s293, %s291
      %s295 = smul.addr %s294, 2
      %s296 = scalar_lea.vmem %s5, %s295
      %v297 = vld [vmem:[%s275] sm:$0xff]
      %v298 = vld [vmem:[%s275 + $0x8] sm:$0xff]
      %v299 = vld [vmem:[%s2] sm:$0xff]
      %v300 = vld [vmem:[%s2 + $0x8] sm:$0xff]
      %v301 = vld [vmem:[%s3] sm:$0x1]
      %vm302 = vcmask 130048
      %v304 = vsel %vm302, %v297, 0
      %v307 = vsel %vm302, %v298, 0
      %309 = vmatprep.subr.mxu0 0.0
      %310 = vmatpush1.msra.mxu0 %v299
      %311 = vmatprep.subr.mxu0 0.0
      %312 = vmatpush1.msra.mxu0 %v300
      %313 = vmatprep.subr.mxu0 0.0
      %314 = vmatpush1.msra.mxu0 0.0
      %315 = vmatprep.subr.mxu0 0.0
      %316 = vmatpush1.msra.mxu0 0.0
      %317 = vmatprep.subr.mxu0 0.0
      %318 = vmatpush1.msra.mxu0 0.0
      %319 = vmatprep.subr.mxu0 0.0
      %320 = vmatpush1.msra.mxu0 0.0
      %321 = vmatprep.subr.mxu0 0.0
      %322 = vmatpush1.msra.mxu0 0.0
      %323 = vmatprep.subr.mxu0 0.0
      %324 = vmatpush1.msra.mxu0 0.0
      %325 = vmatprep.subr.mxu0 0.0
      %326 = vmatpush1.msra.mxu0 0.0
      %327 = vmatprep.subr.mxu0 0.0
      %328 = vmatpush1.msra.mxu0 0.0
      %329 = vmatprep.subr.mxu0 0.0
      %330 = vmatpush1.msra.mxu0 0.0
      %331 = vmatprep.subr.mxu0 0.0
      %332 = vmatpush1.msra.mxu0 0.0
      %333 = vmatprep.subr.mxu0 0.0
      %334 = vmatpush1.msra.mxu0 0.0
      %335 = vmatprep.subr.mxu0 0.0
      %336 = vmatpush1.msra.mxu0 0.0
      %337 = vmatprep.subr.mxu0 0.0
      %338 = vmatpush1.msra.mxu0 0.0
      %339 = vmatprep.subr.mxu0 0.0
      %340 = vmatpush1.msra.mxu0 0.0
      %341 = vmatprep.subr.mxu0 0.0
      %342 = vmatpush1.msra.mxu0 0.0
      %343 = vmatprep.subr.mxu0 0.0
      %344 = vmatpush1.msra.mxu0 0.0
      %345 = vmatprep.subr.mxu0 0.0
      %346 = vmatpush1.msra.mxu0 0.0
      %347 = vmatprep.subr.mxu0 0.0
      %348 = vmatpush1.msra.mxu0 0.0
      %349 = vmatprep.subr.mxu0 0.0
      %350 = vmatpush1.msra.mxu0 0.0
      %351 = vmatprep.subr.mxu0 0.0
      %352 = vmatpush1.msra.mxu0 0.0
      %353 = vmatprep.subr.mxu0 0.0
      %354 = vmatpush1.msra.mxu0 0.0
      %355 = vmatprep.subr.mxu0 0.0
      %356 = vmatpush1.msra.mxu0 0.0
      %357 = vmatprep.subr.mxu0 0.0
      %358 = vmatpush1.msra.mxu0 0.0
      %359 = vmatprep.subr.mxu0 0.0
      %360 = vmatpush1.msra.mxu0 0.0
      %361 = vmatprep.subr.mxu0 0.0
      %362 = vmatpush1.msra.mxu0 0.0
      %363 = vmatprep.subr.mxu0 0.0
      %364 = vmatpush1.msra.mxu0 0.0
      %365 = vmatprep.subr.mxu0 0.0
      %366 = vmatpush1.msra.mxu0 0.0
      %367 = vmatprep.subr.mxu0 0.0
      %368 = vmatpush1.msra.mxu0 0.0
      %369 = vmatprep.subr.mxu0 0.0
      %370 = vmatpush1.msra.mxu0 0.0
      %371 = vmatprep.subr.mxu0 0.0
      %372 = vmatpush1.msra.mxu0 0.0
      %373 = vmatprep.mubr.f32.mxu0 0.0
      %374 = vmatmul.mubr.f32.gmra.mrb[0].mxu0 %v304
      %v375 = vpop.f32.mrb[0].mxu0
      %v376 = vadd.f32 0.0, %v375
      %v377 = vpop.f32.mrb[0].mxu0
      %378 = vmatprep.mubr.f32.mxu0 0.0
      %379 = vmatmul.mubr.f32.gmra.mrb[0].mxu0 %v307
      %v380 = vpop.f32.mrb[0].mxu0
      %v381 = vadd.f32 0.0, %v380
      %v382 = vpop.f32.mrb[0].mxu0
      %383 = vdwg.mxu0
      %386 = vrot.lane.b32.xlu0 %v376, 112
      %v387 = vpop.permute.xlu0 %386
      %388 = vrot.lane.b32.xlu0 %v381, 112
      %v389 = vpop.permute.xlu0 %388
      %v392 = vrot.slane %v387, 1
      %v393 = vrot.slane %v389, 1
      %v394 = vlaneseq
      %v395 = vshrl.u32 %v394, 7
      %vm396 = vcmp.lt.s32.totalorder %v395, 7
      %v397 = vsel %vm396, %v392, %v393
      %v398 = vsel %vm396, %v393, %v392
      %v399 = vadd.s32 %v395, 8
      %s400 = scalar_lea.vmem %s279, %s22
      %v401 = vld [vmem:[%s400] sm:$0x1]
      %vm402 = vcmp.eq.s32.totalorder %v395, 15
      %vm403 = vcmp.eq.s32.totalorder %v399, 15
      %v404 = vsel %vm402, 1, 0
      %v405 = vsel %vm403, 1, 0
      %vm406 = vcmp.eq.s32.totalorder %v404, 1
      %vm407 = vcmp.eq.s32.totalorder %v405, 1
      %v409 = vlaneseq
      %v410 = vshrl.u32 %v409, 7
      %v411 = vsub.s32 0, %v410
      %v412 = vrot.slane %v401, %v411
      %v414 = vsel %vm406, %v412, %v397
      %v415 = vsel %vm407, %v412, %v398
      %418 = vrot.lane.b32.xlu0 %v414, 8
      %v419 = vpop.permute.xlu0 %418
      %420 = vrot.lane.b32.xlu0 %v415, 8
      %v421 = vpop.permute.xlu0 %420
      %v424 = vadd.f32 %v376, %v419
      %v425 = vadd.f32 %v381, %v421
      %vm426 = vcmask 64512
      %v427 = vsel %vm426, %v376, %v424
      %v428 = vsel %vm426, %v381, %v425
      %v430 = vlaneseq
      %v431 = vshrl.u32 %v430, 7
      %v432 = vsub.s32 0, %v431
      %v433 = vrot.slane %v301, %v432
      %v435 = vadd.f32 %v427, %v433
      %v436 = vadd.f32 %v428, %v433
      %vm437 = vcmp.gt.f32.partialorder %v435, 0.0
      %vm438 = vcmp.gt.f32.partialorder %v436, 0.0
      %v439 = vmin.f32 %v435, 0.0
      %v440 = vmin.f32 %v436, 0.0
      %v441 = vmul.f32 %v439, 1.442695
      %v442 = vpow.pop %v441
      %v443 = vmul.f32 %v440, 1.442695
      %v444 = vpow.pop %v443
      %v445 = vsub.f32 %v442, 1.0
      %v446 = vsub.f32 %v444, 1.0
      %v447 = vsel %vm437, %v435, %v445
      %v448 = vsel %vm438, %v436, %v446
      %449 = vst.msk [vmem:[%s288] sm:$0xff] %vm302, %v447
      %450 = vst.msk [vmem:[%s288 + $0x8] sm:$0xff] %vm302, %v448
      %v451 = vsel %vm302, %v447, 0.0
      %v452 = vsel %vm302, %v448, 0.0
      %v453 = vadd.f32 %v451, %v452
      %v454 = vrot.slane %v453, 4
      %v455 = vadd.f32 %v453, %v454
      %v456 = vrot.slane %v455, 2
      %v457 = vadd.f32 %v455, %v456
      %v458 = vrot.slane %v457, 1
      %v459 = vadd.f32 %v457, %v458
      %v460 = vmul.f32 %v447, %v447
      %v461 = vmul.f32 %v448, %v448
      %v462 = vsel %vm302, %v460, 0.0
      %v463 = vsel %vm302, %v461, 0.0
      %v464 = vadd.f32 %v462, %v463
      %v465 = vrot.slane %v464, 4
      %v466 = vadd.f32 %v464, %v465
      %v467 = vrot.slane %v466, 2
      %v468 = vadd.f32 %v466, %v467
      %v469 = vrot.slane %v468, 1
      %v470 = vadd.f32 %v468, %v469
      %vm471 = vcmask 122880
      %472 = vst.msk [vmem:[%s296] sm:$0x1] %vm471, %v459
      %473 = vst.msk [vmem:[%s296 + $0x1] sm:$0x1] %vm471, %v470
      %s474 = smul.u32 2, %s22
      %p475 = scmp.lt.s32.totalorder %s21, 1
      %s476 = scalar_select %p475, %s21, 1
      %p477 = scmp.lt.s32.totalorder %s474, 1
      %s478 = scalar_select %p477, %s474, 1
      %s479 = smul.addr %s476, 2
      %s480 = sadd.s32 %s478, %s479
      %s481 = smul.addr %s480, 8
      %s482 = scalar_lea.vmem %s4, %s481
      %p483 = scmp.lt.s32.totalorder %s21, 1
      %s484 = scalar_select %p483, %s21, 1
      %p485 = scmp.lt.s32.totalorder %s22, 0
      %s486 = scalar_select %p485, %s22, 0
      %s487 = sadd.s32 %s486, %s484
      %s488 = smul.addr %s487, 2
      %s489 = scalar_lea.vmem %s5, %s488
      // Predicated region
      $region37: #{decoder_forward.4} parent=35 // pred_check
        %p490 = pneg %p145
      $region38: #{decoder_forward.4} parent=35 // pred_check_branch
        %492 = sbr.rel (%p490) target = $region40
      $region39: #{decoder_forward.4} parent=35 // pred_region
        %s493 = smul.u32 2, %s22
      $region40: #{decoder_forward.4} parent=35 // pred_fallthru
        _
      // Predicated region
      $region41: #{decoder_forward.4} parent=35 // pred_check
        %p494 = pneg %p173
      $region42: #{decoder_forward.4} parent=35 // pred_check_branch
        %496 = sbr.rel (%p494) target = $region44
      $region43: #{decoder_forward.4} parent=35 // pred_region
        _
      $region44: #{decoder_forward.4} parent=35 // pred_fallthru
        _
    $region36: #{decoder_forward.4} parent=5 // pred_fallthru
      _
    %p497 = scmp.le.s32.totalorder 2, %s12
    // Predicated region
    $region45: #{decoder_forward.4} parent=5 // pred_check
      %p498 = pneg %p497
    $region46: #{decoder_forward.4} parent=5 // pred_check_branch
      %500 = sbr.rel (%p498) target = $region48
    $region47: #{decoder_forward.4} parent=5 // pred_region
      %s501 = ssub.s32 %s12, 2
      // Predicated region
      $region49: #{decoder_forward.4} parent=47 // pred_check
        %p502 = pneg %p151
      $region50: #{decoder_forward.4} parent=47 // pred_check_branch
        %504 = sbr.rel (%p502) target = $region52
      $region51: #{decoder_forward.4} parent=47 // pred_region
        %s505 = smul.u32 2, %s24
        %p506 = scmp.lt.s32.totalorder %s23, 1
        %s507 = scalar_select %p506, %s23, 1
        %p508 = scmp.lt.s32.totalorder %s505, 1
        %s509 = scalar_select %p508, %s505, 1
        %s510 = smul.addr %s507, 2
        %s511 = sadd.s32 %s509, %s510
        %s512 = smul.addr %s511, 8
        %s513 = scalar_lea.vmem %s4, %s512
      $region52: #{decoder_forward.4} parent=47 // pred_fallthru
        _
      // Predicated region
      $region53: #{decoder_forward.4} parent=47 // pred_check
        %p514 = pneg %p179
      $region54: #{decoder_forward.4} parent=47 // pred_check_branch
        %516 = sbr.rel (%p514) target = $region56
      $region55: #{decoder_forward.4} parent=47 // pred_region
        %p517 = scmp.lt.s32.totalorder %s23, 1
        %s518 = scalar_select %p517, %s23, 1
        %p519 = scmp.lt.s32.totalorder %s24, 0
        %s520 = scalar_select %p519, %s24, 0
        %s521 = sadd.s32 %s520, %s518
        %s522 = smul.addr %s521, 2
        %s523 = scalar_lea.vmem %s5, %s522
      $region56: #{decoder_forward.4} parent=47 // pred_fallthru
        _
    $region48: #{decoder_forward.4} parent=5 // pred_fallthru
      _
  $region6: #{decoder_forward.4} parent=0 // loop_footer
    %s16 = sadd.s32 1, %s12
  $region7: #{decoder_forward.4} parent=0 // loop_footer_branch
    %11 = sbr.rel target = $region3
  $region8: #{decoder_forward.4} parent=0 // loop_exit
    _

// kernel: decoder_forward.5
$region0: #{decoder_forward.5}
  #allocation0 [shape = 'u32[]', space=smem, size = 0x4, offset = 0x4, fixed_abs, tag = 'smem constant byte address 0x4 - core index']
  #allocation1 [shape = 'u32[144,128]{1,0:T(1,128)}', space=vmem, size = 0x12000, scoped, tag = 'internal scratch']
  %s0 = inlined_call_operand.vmem [shape: f32[2,32,8], index: 0, kind: input, shape index: {}]
  %s1 = inlined_call_operand.vmem [shape: f32[2,1,4], index: 1, kind: input, shape index: {}]
  %s2 = inlined_call_operand.vmem [shape: f32[8,12], index: 2, kind: input, shape index: {}]
  %s3 = inlined_call_operand.vmem [shape: f32[1,12], index: 3, kind: input, shape index: {}]
  %s4 = inlined_call_operand.vmem [shape: f32[2,32,8], index: 4, kind: output, shape index: {}]
  %s5 = sld [smem:[#allocation0]]
  $region49: #{decoder_forward.5} parent=0
    _
  %s7 = ssub.s32 1, %s5
  %s8 = scalar_select 0, %s7, %s5
  loop: start=0, step=1, limit=4
  $region2: #{decoder_forward.5} parent=0 // loop_pre_header
    _
  $region3: #{decoder_forward.5} parent=0 // loop_header
    %s10 = sphi 0, %s14
    %p11 = scmp.ge.s32.totalorder %s10, 4
    %s17 = sphi 0, %s29
    %s18 = sphi 0, %s25
    %s19 = sphi 0, %s17
    %s20 = sphi 0, %s18
    %s21 = sphi 0, %s19
    %s22 = sphi 0, %s20
    %s34 = sphi 0, %s36
    %s37 = sphi 0, %s34
    %s38 = sphi 0, %s37
    %s54 = sphi 0, %s38
    %s60 = sphi 0, %s62
    %s63 = sphi 0, %s60
    %s64 = sphi 0, %s63
    %s80 = sphi 0, %s64
    %s84 = sphi 0, %s84
    %s86 = sphi 0, %s84
    %s87 = sphi 0, %s86
    %s101 = sphi 0, %s87
    %s105 = sphi 0, %s105
    %s107 = sphi 0, %s105
    %s108 = sphi 0, %s107
    %s122 = sphi 0, %s108
    %s130 = sphi 0, %s132
    %s133 = sphi 0, %s130
    %s134 = sphi 0, %s133
    %s150 = sphi 0, %s134
  $region4: #{decoder_forward.5} parent=0 // loop_header_branch
    %13 = sbr.rel (%p11) target = $region8
  $region5: #{decoder_forward.5} parent=0 // loop_body
    %s15 = ssub.s32 %s10, 1
    %s16 = ssub.s32 %s10, 2
    %s23 = sadd.s32 1, %s18
    %p24 = scmp.ge.s32.totalorder %s23, 1
    %s25 = scalar_select %p24, 0, %s23
    %s26 = sadd.s32 1, %s17
    %s27 = scalar_select %p24, %s26, %s17
    %p28 = scmp.ge.s32.totalorder %s27, 2
    %s29 = scalar_select %p28, 0, %s27
    %s30 = ssub.s32 %s17, %s29
    %s31 = ssub.s32 %s18, %s25
    %s32 = sor.u32 %s30, %s31
    %p33 = scmp.eq.s32.totalorder %s32, 0
    %s35 = sadd.s32 %s34, 1
    %s36 = scalar_select %p33, %s34, %s35
    %p39 = pneg %p33
    %p40 = scmp.eq.s32.totalorder %s10, 1
    %p41 = por %p39, %p40
    %p42 = scmp.ne.s32.totalorder %s34, %s37
    %p43 = scmp.eq.s32.totalorder %s10, 0
    %p44 = por %p42, %p43
    %p45 = scmp.ne.s32.totalorder %s34, %s37
    %p46 = scmp.eq.s32.totalorder %s15, 1
    %p47 = por %p45, %p46
    %p48 = scmp.ne.s32.totalorder %s37, %s38
    %p49 = scmp.eq.s32.totalorder %s15, 0
    %p50 = por %p48, %p49
    %p51 = scmp.ne.s32.totalorder %s37, %s38
    %p52 = scmp.eq.s32.totalorder %s16, 1
    %p53 = por %p51, %p52
    %p55 = scmp.ne.s32.totalorder %s38, %s54
    %p56 = scmp.eq.s32.totalorder %s16, 0
    %p57 = por %p55, %p56
    %s58 = ssub.s32 %s17, %s29
    %p59 = scmp.eq.s32.totalorder %s58, 0
    %s61 = sadd.s32 %s60, 1
    %s62 = scalar_select %p59, %s60, %s61
    %p65 = pneg %p59
    %p66 = scmp.eq.s32.totalorder %s10, 1
    %p67 = por %p65, %p66
    %p68 = scmp.ne.s32.totalorder %s60, %s63
    %p69 = scmp.eq.s32.totalorder %s10, 0
    %p70 = por %p68, %p69
    %p71 = scmp.ne.s32.totalorder %s60, %s63
    %p72 = scmp.eq.s32.totalorder %s15, 1
    %p73 = por %p71, %p72
    %p74 = scmp.ne.s32.totalorder %s63, %s64
    %p75 = scmp.eq.s32.totalorder %s15, 0
    %p76 = por %p74, %p75
    %p77 = scmp.ne.s32.totalorder %s63, %s64
    %p78 = scmp.eq.s32.totalorder %s16, 1
    %p79 = por %p77, %p78
    %p81 = scmp.ne.s32.totalorder %s64, %s80
    %p82 = scmp.eq.s32.totalorder %s16, 0
    %p83 = por %p81, %p82
    %s85 = sadd.s32 %s84, 1
    %p88 = scmp.eq.s32.totalorder %s10, 1
    %p89 = scmp.ne.s32.totalorder %s84, %s86
    %p90 = scmp.eq.s32.totalorder %s10, 0
    %p91 = por %p89, %p90
    %p92 = scmp.ne.s32.totalorder %s84, %s86
    %p93 = scmp.eq.s32.totalorder %s15, 1
    %p94 = por %p92, %p93
    %p95 = scmp.ne.s32.totalorder %s86, %s87
    %p96 = scmp.eq.s32.totalorder %s15, 0
    %p97 = por %p95, %p96
    %p98 = scmp.ne.s32.totalorder %s86, %s87
    %p99 = scmp.eq.s32.totalorder %s16, 1
    %p100 = por %p98, %p99
    %p102 = scmp.ne.s32.totalorder %s87, %s101
    %p103 = scmp.eq.s32.totalorder %s16, 0
    %p104 = por %p102, %p103
    %s106 = sadd.s32 %s105, 1
    %p109 = scmp.eq.s32.totalorder %s10, 1
    %p110 = scmp.ne.s32.totalorder %s105, %s107
    %p111 = scmp.eq.s32.totalorder %s10, 0
    %p112 = por %p110, %p111
    %p113 = scmp.ne.s32.totalorder %s105, %s107
    %p114 = scmp.eq.s32.totalorder %s15, 1
    %p115 = por %p113, %p114
    %p116 = scmp.ne.s32.totalorder %s107, %s108
    %p117 = scmp.eq.s32.totalorder %s15, 0
    %p118 = por %p116, %p117
    %p119 = scmp.ne.s32.totalorder %s107, %s108
    %p120 = scmp.eq.s32.totalorder %s16, 1
    %p121 = por %p119, %p120
    %p123 = scmp.ne.s32.totalorder %s108, %s122
    %p124 = scmp.eq.s32.totalorder %s16, 0
    %p125 = por %p123, %p124
    %s126 = ssub.s32 %s17, %s29
    %s127 = ssub.s32 %s18, %s25
    %s128 = sor.u32 %s126, %s127
    %p129 = scmp.eq.s32.totalorder %s128, 0
    %s131 = sadd.s32 %s130, 1
    %s132 = scalar_select %p129, %s130, %s131
    %p135 = pneg %p129
    %p136 = scmp.eq.s32.totalorder %s10, 1
    %p137 = por %p135, %p136
    %p138 = scmp.ne.s32.totalorder %s130, %s133
    %p139 = scmp.eq.s32.totalorder %s10, 0
    %p140 = por %p138, %p139
    %p141 = scmp.ne.s32.totalorder %s130, %s133
    %p142 = scmp.eq.s32.totalorder %s15, 1
    %p143 = por %p141, %p142
    %p144 = scmp.ne.s32.totalorder %s133, %s134
    %p145 = scmp.eq.s32.totalorder %s15, 0
    %p146 = por %p144, %p145
    %p147 = scmp.ne.s32.totalorder %s133, %s134
    %p148 = scmp.eq.s32.totalorder %s16, 1
    %p149 = por %p147, %p148
    %p151 = scmp.ne.s32.totalorder %s134, %s150
    %p152 = scmp.eq.s32.totalorder %s16, 0
    %p153 = por %p151, %p152
    %p154 = scmp.le.s32.totalorder 1, %s10
    %p155 = scmp.lt.s32.totalorder %s10, 3
    %p156 = pnand %p154, %p155
    %p157 = pneg %p156
    // Predicated region
    $region9: #{decoder_forward.5} parent=5 // pred_check
      _
    $region10: #{decoder_forward.5} parent=5 // pred_check_branch
      %159 = sbr.rel (%p156) target = $region12
    $region11: #{decoder_forward.5} parent=5 // pred_region
      %s160 = ssub.s32 %s10, 1
      // Predicated region
      $region13: #{decoder_forward.5} parent=11 // pred_check
        %p161 = pneg %p97
      $region14: #{decoder_forward.5} parent=11 // pred_check_branch
        %163 = sbr.rel (%p161) target = $region16
      $region15: #{decoder_forward.5} parent=11 // pred_region
        _
      $region16: #{decoder_forward.5} parent=11 // pred_fallthru
        _
      // Predicated region
      $region17: #{decoder_forward.5} parent=11 // pred_check
        %p164 = pneg %p118
      $region18: #{decoder_forward.5} parent=11 // pred_check_branch
        %166 = sbr.rel (%p164) target = $region20
      $region19: #{decoder_forward.5} parent=11 // pred_region
        _
      $region20: #{decoder_forward.5} parent=11 // pred_fallthru
        _
    $region12: #{decoder_forward.5} parent=5 // pred_fallthru
      _
    %p167 = scmp.lt.s32.totalorder %s10, 2
    // Predicated region
    $region21: #{decoder_forward.5} parent=5 // pred_check
      %p168 = pneg %p167
    $region22: #{decoder_forward.5} parent=5 // pred_check_branch
      %170 = sbr.rel (%p168) target = $region24
    $region23: #{decoder_forward.5} parent=5 // pred_region
      // Predicated region
      $region25: #{decoder_forward.5} parent=23 // pred_check
        %p171 = pneg %p44
      $region26: #{decoder_forward.5} parent=23 // pred_check_branch
        %173 = sbr.rel (%p171) target = $region28
      $region27: #{decoder_forward.5} parent=23 // pred_region
        %s174 = smul.u32 4, %s18
        %p175 = scmp.lt.s32.totalorder %s17, 1
        %s176 = scalar_select %p175, %s17, 1
        %p177 = scmp.lt.s32.totalorder %s174, 3
        %s178 = scalar_select %p177, %s174, 3
        %s179 = smul.addr %s176, 4
        %s180 = sadd.s32 %s178, %s179
        %s181 = smul.addr %s180, 8
        %s182 = scalar_lea.vmem %s0, %s181
        %s183 = smul.u32 4, %s18
      $region28: #{decoder_forward.5} parent=23 // pred_fallthru
        _
      // Predicated region
      $region29: #{decoder_forward.5} parent=23 // pred_check
        %p184 = pneg %p70
      $region30: #{decoder_forward.5} parent=23 // pred_check_branch
        %186 = sbr.rel (%p184) target = $region32
      $region31: #{decoder_forward.5} parent=23 // pred_region
        %p187 = scmp.lt.s32.totalorder %s17, 1
        %s188 = scalar_select %p187, %s17, 1
        %s189 = scalar_lea.vmem %s1, %s188
      $region32: #{decoder_forward.5} parent=23 // pred_fallthru
        _
    $region24: #{decoder_forward.5} parent=5 // pred_fallthru
      _
    %p190 = scmp.le.s32.totalorder 1, %s10
    %p191 = scmp.lt.s32.totalorder %s10, 3
    %p192 = pnand %p190, %p191
    %p193 = pneg %p192
    // Predicated region
    $region33: #{decoder_forward.5} parent=5 // pred_check
      _
    $region34: #{decoder_forward.5} parent=5 // pred_check_branch
      %195 = sbr.rel (%p192) target = $region36
    $region35: #{decoder_forward.5} parent=5 // pred_region
      %s196 = ssub.s32 %s10, 1
      %s197 = smul.u32 4, %s20
      %p198 = scmp.lt.s32.totalorder %s19, 1
      %s199 = scalar_select %p198, %s19, 1
      %p200 = scmp.lt.s32.totalorder %s197, 3
      %s201 = scalar_select %p200, %s197, 3
      %s202 = smul.addr %s199, 4
      %s203 = sadd.s32 %s201, %s202
      %s204 = smul.addr %s203, 8
      %s205 = scalar_lea.vmem %s0, %s204
      %p206 = pneg %p50
      %p207 = pneg %p47
      %p208 = scmp.lt.s32.totalorder %s19, 1
      %s209 = scalar_select %p208, %s19, 1
      %s210 = scalar_lea.vmem %s1, %s209
      %p211 = pneg %p76
      %p212 = pneg %p73
      %p213 = pneg %p97
      %p214 = pneg %p94
      %p215 = pneg %p118
      %p216 = pneg %p115
      %p217 = pneg %p146
      %p218 = pneg %p143
      %s219 = smul.u32 4, %s20
      %p220 = scmp.lt.s32.totalorder %s19, 1
      %s221 = scalar_select %p220, %s19, 1
      %p222 = scmp.lt.s32.totalorder %s219, 3
      %s223 = scalar_select %p222, %s219, 3
      %s224 = smul.addr %s221, 4
      %s225 = sadd.s32 %s223, %s224
      %s226 = smul.addr %s225, 8
      %s227 = scalar_lea.vmem %s4, %s226
      %s228 = smul.u32 4, %s20
      %p229 = scmp.lt.s32.totalorder %s19, 1
      %s230 = scalar_select %p229, %s19, 1
      %p231 = scmp.lt.s32.totalorder %s228, 3
      %s232 = scalar_select %p231, %s228, 3
      %s233 = smul.addr %s230, 4
      %s234 = sadd.s32 %s232, %s233
      %s235 = smul.addr %s234, 8
      %s236 = scalar_lea.vmem %s0, %s235
      %s237 = smul.u32 4, %s20
      %p238 = scmp.lt.s32.totalorder %s19, 1
      %s239 = scalar_select %p238, %s19, 1
      %s240 = scalar_lea.vmem %s1, %s239
      %s241 = smul.u32 4, %s20
      %p242 = scmp.lt.s32.totalorder %s19, 1
      %s243 = scalar_select %p242, %s19, 1
      %p244 = scmp.lt.s32.totalorder %s241, 3
      %s245 = scalar_select %p244, %s241, 3
      %s246 = smul.addr %s243, 4
      %s247 = sadd.s32 %s245, %s246
      %s248 = smul.addr %s247, 8
      %s249 = scalar_lea.vmem %s4, %s248
      %s250 = smul.u32 4, %s20
      %v251 = vld [vmem:[%s236] sm:$0xff]
      %v252 = vld [vmem:[%s236 + $0x8] sm:$0xff]
      %v253 = vld [vmem:[%s236 + $0x10] sm:$0xff]
      %v254 = vld [vmem:[%s236 + $0x18] sm:$0xff]
      %v255 = vld [vmem:[%s2] sm:$0xff]
      %v256 = vld [vmem:[%s3] sm:$0x1]
      %vm257 = vcmask 64512
      %v259 = vsel %vm257, %v251, 0
      %v262 = vsel %vm257, %v252, 0
      %v265 = vsel %vm257, %v253, 0
      %v268 = vsel %vm257, %v254, 0
      %270 = vmatprep.subr.mxu0 0.0
      %271 = vmatpush1.msra.mxu0 %v255
      %272 = vmatprep.subr.mxu0 0.0
      %273 = vmatpush1.msra.mxu0 0.0
      %274 = vmatprep.subr.mxu0 0.0
      %275 = vmatpush1.msra.mxu0 0.0
      %276 = vmatprep.subr.mxu0 0.0
      %277 = vmatpush1.msra.mxu0 0.0
      %278 = vmatprep.subr.mxu0 0.0
      %279 = vmatpush1.msra.mxu0 0.0
      %280 = vmatprep.subr.mxu0 0.0
      %281 = vmatpush1.msra.mxu0 0.0
      %282 = vmatprep.subr.mxu0 0.0
      %283 = vmatpush1.msra.mxu0 0.0
      %284 = vmatprep.subr.mxu0 0.0
      %285 = vmatpush1.msra.mxu0 0.0
      %286 = vmatprep.subr.mxu0 0.0
      %287 = vmatpush1.msra.mxu0 0.0
      %288 = vmatprep.subr.mxu0 0.0
      %289 = vmatpush1.msra.mxu0 0.0
      %290 = vmatprep.subr.mxu0 0.0
      %291 = vmatpush1.msra.mxu0 0.0
      %292 = vmatprep.subr.mxu0 0.0
      %293 = vmatpush1.msra.mxu0 0.0
      %294 = vmatprep.subr.mxu0 0.0
      %295 = vmatpush1.msra.mxu0 0.0
      %296 = vmatprep.subr.mxu0 0.0
      %297 = vmatpush1.msra.mxu0 0.0
      %298 = vmatprep.subr.mxu0 0.0
      %299 = vmatpush1.msra.mxu0 0.0
      %300 = vmatprep.subr.mxu0 0.0
      %301 = vmatpush1.msra.mxu0 0.0
      %302 = vmatprep.subr.mxu0 0.0
      %303 = vmatpush1.msra.mxu0 0.0
      %304 = vmatprep.subr.mxu0 0.0
      %305 = vmatpush1.msra.mxu0 0.0
      %306 = vmatprep.subr.mxu0 0.0
      %307 = vmatpush1.msra.mxu0 0.0
      %308 = vmatprep.subr.mxu0 0.0
      %309 = vmatpush1.msra.mxu0 0.0
      %310 = vmatprep.subr.mxu0 0.0
      %311 = vmatpush1.msra.mxu0 0.0
      %312 = vmatprep.subr.mxu0 0.0
      %313 = vmatpush1.msra.mxu0 0.0
      %314 = vmatprep.subr.mxu0 0.0
      %315 = vmatpush1.msra.mxu0 0.0
      %316 = vmatprep.subr.mxu0 0.0
      %317 = vmatpush1.msra.mxu0 0.0
      %318 = vmatprep.subr.mxu0 0.0
      %319 = vmatpush1.msra.mxu0 0.0
      %320 = vmatprep.subr.mxu0 0.0
      %321 = vmatpush1.msra.mxu0 0.0
      %322 = vmatprep.subr.mxu0 0.0
      %323 = vmatpush1.msra.mxu0 0.0
      %324 = vmatprep.subr.mxu0 0.0
      %325 = vmatpush1.msra.mxu0 0.0
      %326 = vmatprep.subr.mxu0 0.0
      %327 = vmatpush1.msra.mxu0 0.0
      %328 = vmatprep.subr.mxu0 0.0
      %329 = vmatpush1.msra.mxu0 0.0
      %330 = vmatprep.subr.mxu0 0.0
      %331 = vmatpush1.msra.mxu0 0.0
      %332 = vmatprep.subr.mxu0 0.0
      %333 = vmatpush1.msra.mxu0 0.0
      %334 = vmatprep.mubr.f32.mxu0 0.0
      %335 = vmatmul.mubr.f32.gmra.mrb[0].mxu0 %v259
      %v336 = vpop.f32.mrb[0].mxu0
      %v337 = vadd.f32 0.0, %v336
      %v338 = vpop.f32.mrb[0].mxu0
      %339 = vmatprep.mubr.f32.mxu0 0.0
      %340 = vmatmul.mubr.f32.gmra.mrb[0].mxu0 %v262
      %v341 = vpop.f32.mrb[0].mxu0
      %v342 = vadd.f32 0.0, %v341
      %v343 = vpop.f32.mrb[0].mxu0
      %344 = vmatprep.mubr.f32.mxu0 0.0
      %345 = vmatmul.mubr.f32.gmra.mrb[0].mxu0 %v265
      %v346 = vpop.f32.mrb[0].mxu0
      %v347 = vadd.f32 0.0, %v346
      %v348 = vpop.f32.mrb[0].mxu0
      %349 = vmatprep.mubr.f32.mxu0 0.0
      %350 = vmatmul.mubr.f32.gmra.mrb[0].mxu0 %v268
      %v351 = vpop.f32.mrb[0].mxu0
      %v352 = vadd.f32 0.0, %v351
      %v353 = vpop.f32.mrb[0].mxu0
      %354 = vdwg.mxu0
      %359 = vrot.lane.b32.xlu0 %v337, 120
      %v360 = vpop.permute.xlu0 %359
      %361 = vrot.lane.b32.xlu0 %v342, 120
      %v362 = vpop.permute.xlu0 %361
      %363 = vrot.lane.b32.xlu0 %v347, 120
      %v364 = vpop.permute.xlu0 %363
      %365 = vrot.lane.b32.xlu0 %v352, 120
      %v366 = vpop.permute.xlu0 %365
      %v371 = vrot.slane %v360, 1
      %v372 = vrot.slane %v362, 1
      %v373 = vrot.slane %v364, 1
      %v374 = vrot.slane %v366, 1
      %v375 = vlaneseq
      %v376 = vshrl.u32 %v375, 7
      %vm377 = vcmp.lt.s32.totalorder %v376, 7
      %v378 = vsel %vm377, %v373, %v374
      %v379 = vsel %vm377, %v372, %v373
      %v380 = vsel %vm377, %v371, %v372
      %v381 = vsel %vm377, %v374, %v371
      %v382 = vadd.s32 %v376, 8
      %v383 = vadd.s32 %v376, 16
      %v384 = vadd.s32 %v376, 24
      %s385 = scalar_lea.vmem %s240, %s20
      %v386 = vld [vmem:[%s385] sm:$0x1]
      %vm387 = vcmp.eq.s32.totalorder %v376, 31
      %vm388 = vcmp.eq.s32.totalorder %v382, 31
      %vm389 = vcmp.eq.s32.totalorder %v383, 31
      %vm390 = vcmp.eq.s32.totalorder %v384, 31
      %v391 = vsel %vm387, 1, 0
      %v392 = vsel %vm388, 1, 0
      %v393 = vsel %vm389, 1, 0
      %v394 = vsel %vm390, 1, 0
      %vm395 = vcmp.eq.s32.totalorder %v391, 1
      %vm396 = vcmp.eq.s32.totalorder %v392, 1
      %vm397 = vcmp.eq.s32.totalorder %v393, 1
      %vm398 = vcmp.eq.s32.totalorder %v394, 1
      %v400 = vlaneseq
      %v401 = vshrl.u32 %v400, 7
      %v402 = vsub.s32 0, %v401
      %v403 = vrot.slane %v386, %v402
      %v405 = vsel %vm395, %v403, %v380
      %v406 = vsel %vm396, %v403, %v379
      %v407 = vsel %vm397, %v403, %v378
      %v408 = vsel %vm398, %v403, %v381
      %413 = vrot.lane.b32.xlu0 %v405, 4
      %v414 = vpop.permute.xlu0 %413
      %415 = vrot.lane.b32.xlu0 %v406, 4
      %v416 = vpop.permute.xlu0 %415
      %417 = vrot.lane.b32.xlu0 %v407, 4
      %v418 = vpop.permute.xlu0 %417
      %419 = vrot.lane.b32.xlu0 %v408, 4
      %v420 = vpop.permute.xlu0 %419
      %v425 = vadd.f32 %v337, %v414
      %v426 = vadd.f32 %v342, %v416
      %v427 = vadd.f32 %v347, %v418
      %v428 = vadd.f32 %v352, %v420
      %vm429 = vcmask 31744
      %v430 = vsel %vm429, %v337, %v425
      %v431 = vsel %vm429, %v342, %v426
      %v432 = vsel %vm429, %v347, %v427
      %v433 = vsel %vm429, %v352, %v428
      %v435 = vlaneseq
      %v436 = vshrl.u32 %v435, 7
      %v437 = vsub.s32 0, %v436
      %v438 = vrot.slane %v256, %v437
      %v440 = vadd.f32 %v430, %v438
      %v441 = vadd.f32 %v431, %v438
      %v442 = vadd.f32 %v432, %v438
      %v443 = vadd.f32 %v433, %v438
      %444 = vst.msk [vmem:[%s249] sm:$0xff] %vm257, %v440
      %445 = vst.msk [vmem:[%s249 + $0x8] sm:$0xff] %vm257, %v441
      %446 = vst.msk [vmem:[%s249 + $0x10] sm:$0xff] %vm257, %v442
      %447 = vst.msk [vmem:[%s249 + $0x18] sm:$0xff] %vm257, %v443
      %s448 = smul.u32 4, %s20
      %p449 = scmp.lt.s32.totalorder %s19, 1
      %s450 = scalar_select %p449, %s19, 1
      %p451 = scmp.lt.s32.totalorder %s448, 3
      %s452 = scalar_select %p451, %s448, 3
      %s453 = smul.addr %s450, 4
      %s454 = sadd.s32 %s452, %s453
      %s455 = smul.addr %s454, 8
      %s456 = scalar_lea.vmem %s4, %s455
      // Predicated region
      $region37: #{decoder_forward.5} parent=35 // pred_check
        %p457 = pneg %p143
      $region38: #{decoder_forward.5} parent=35 // pred_check_branch
        %459 = sbr.rel (%p457) target = $region40
      $region39: #{decoder_forward.5} parent=35 // pred_region
        %s460 = smul.u32 4, %s20
      $region40: #{decoder_forward.5} parent=35 // pred_fallthru
        _
    $region36: #{decoder_forward.5} parent=5 // pred_fallthru
      _
    %p461 = scmp.le.s32.totalorder 2, %s10
    // Predicated region
    $region41: #{decoder_forward.5} parent=5 // pred_check
      %p462 = pneg %p461
    $region42: #{decoder_forward.5} parent=5 // pred_check_branch
      %464 = sbr.rel (%p462) target = $region44
    $region43: #{decoder_forward.5} parent=5 // pred_region
      %s465 = ssub.s32 %s10, 2
      // Predicated region
      $region45: #{decoder_forward.5} parent=43 // pred_check
        %p466 = pneg %p149
      $region46: #{decoder_forward.5} parent=43 // pred_check_branch
        %468 = sbr.rel (%p466) target = $region48
      $region47: #{decoder_forward.5} parent=43 // pred_region
        %s469 = smul.u32 4, %s22
        %p470 = scmp.lt.s32.totalorder %s21, 1
        %s471 = scalar_select %p470, %s21, 1
        %p472 = scmp.lt.s32.totalorder %s469, 3
        %s473 = scalar_select %p472, %s469, 3
        %s474 = smul.addr %s471, 4
        %s475 = sadd.s32 %s473, %s474
        %s476 = smul.addr %s475, 8
        %s477 = scalar_lea.vmem %s4, %s476
      $region48: #{decoder_forward.5} parent=43 // pred_fallthru
        _
    $region44: #{decoder_forward.5} parent=5 // pred_fallthru
      _
  $region6: #{decoder_forward.5} parent=0 // loop_footer
    %s14 = sadd.s32 1, %s10
  $region7: #{decoder_forward.5} parent=0 // loop_footer_branch
    %9 = sbr.rel target = $region3
  $region8: #{decoder_forward.5} parent=0 // loop_exit
    _

</llo_original>
